<compile_context>
chip_gen: v7x
topology: tpu7x:2x2x1
jax: 0.10.0
libtpu: 0.0.40
codegen_flags: <defaults>
</compile_context>

<pallas_src>
import functools

import numpy as np
import jax
import jax.numpy as jnp
from jax import lax
from jax.experimental import pallas as pl
from jax.experimental.pallas import tpu as pltpu


def _round_up(x, m):
    return ((x + m - 1) // m) * m


def _vmem_bytes(block_b, block_p, D, H, C):
    """Rough per-step VMEM estimate: double-buffered tiles + live temporaries."""
    f32 = 4
    dbl = 2 * f32
    est = dbl * block_b * (D + block_p + C)               # X, Js, fs tiles
    est += dbl * (H + D + 2 * H + 1) * block_p            # placement tiles
    est += dbl * (H * D + H + C * H + C)                  # weights (broadcast)
    est += f32 * block_b * 2 * H                          # gh scratch
    est += 4 * f32 * block_b * block_p                    # ~4 f32 temporaries
    return est


def _pick_tiling(B, D, H, C, P_pad, vmem_budget=24 * 1024 * 1024):
    """Pick (block_b, block_p) from a VMEM budget that is safe on v5e/v6e/v7x."""
    n128 = P_pad // 128
    p_opts = sorted({128 * t for t in range(1, n128 + 1)
                     if n128 % t == 0 and 128 * t <= 2048}, reverse=True)
    block_p = p_opts[-1]
    block_b = 8
    for bp in p_opts:
        bb = min(256, _round_up(B, 8))
        while bb > 8 and _vmem_bytes(bb, bp, D, H, C) > vmem_budget:
            bb -= 8
        if _vmem_bytes(bb, bp, D, H, C) <= vmem_budget:
            block_b, block_p = bb, bp
            break
    # Ensure the (parallel) batch axis has >= 2 grid steps when the data allows
    # it, so both TensorCores get work on v7x megacore.
    if -(-B // block_b) < 2 and B > 8:
        block_b = max(8, (_round_up(B, 8) // 2) // 8 * 8)
    return block_b, block_p


def _placement_matrices(D, H, C, P_pad, output, dtype):
    """Grid-invariant 0/1 placement matrices, built once in the wrapper."""
    HD = H * D
    off_b1 = HD
    off_w2 = HD + H
    off_b2 = off_w2 + C * H
    col = jnp.arange(P_pad, dtype=jnp.int32)[None, :]               # (1, P_pad)
    row_h = jnp.arange(H, dtype=jnp.int32)[:, None]                 # (H, 1)
    row_d = jnp.arange(D, dtype=jnp.int32)[:, None]                 # (D, 1)
    t_rep = ((col < HD) & (col // D == row_h)).astype(dtype)        # g  -> W1 rows
    t_til = ((col < HD) & (col % D == row_d)).astype(dtype)         # x  -> W1 cols
    s_b1 = (col == off_b1 + row_h).astype(dtype)                    # g  -> b1
    s_w2 = (col == off_w2 + output * H + row_h).astype(dtype)       # h  -> W2[output]
    s_gh = jnp.concatenate([s_b1, s_w2], axis=0)                    # (2H, P_pad) fused
    b2row = (col == off_b2 + output).astype(jnp.float32)            # (1, P_pad)
    return t_rep, t_til, s_gh, b2row


def _jacobian_kernel(x_ref, w1_ref, b1_ref, w2_ref, b2_ref,
                     t_rep_ref, t_til_ref, s_gh_ref, b2row_ref,
                     js_ref, fs_ref, gh_sc, *, out_idx, H):
    j = pl.program_id(1)

    # Forward pass + backprop into the hidden layer: grid-invariant along the
    # P axis, so compute it once per batch block and cache [g | h] in scratch.
    @pl.when(j == 0)
    def _():
        X = x_ref[...].astype(jnp.float32)                      # (BB, D)
        W1 = w1_ref[...].astype(jnp.float32)                    # (H, D)
        b1 = b1_ref[...].astype(jnp.float32)                    # (1, H)
        W2 = w2_ref[...].astype(jnp.float32)                    # (C, H)
        b2 = b2_ref[...].astype(jnp.float32)                    # (1, C)
        pre = lax.dot_general(X, W1, (((1,), (1,)), ((), ())),
                              preferred_element_type=jnp.float32) + b1   # (BB, H)
        h = jnp.tanh(pre)                                                # (BB, H)
        f = lax.dot_general(h, W2, (((1,), (1,)), ((), ())),
                            preferred_element_type=jnp.float32) + b2     # (BB, C)
        fs_ref[...] = f.astype(fs_ref.dtype)
        g = (1.0 - h * h) * W2[out_idx:out_idx + 1, :]                   # (BB, H)
        gh_sc[...] = jnp.concatenate([g, h], axis=1).astype(gh_sc.dtype)

    # One lane-dense (BB, block_p) Js tile: three MXU matmuls against the
    # precomputed placement matrices (each column has at most one 1, so the
    # "scatter" is exact), one VPU combine, one unmasked full-block store.
    dt = t_rep_ref.dtype
    gh = gh_sc[...].astype(dt)                                   # (BB, 2H)
    g = gh_sc[:, 0:H].astype(dt)                                 # (BB, H)
    X = x_ref[...].astype(dt)                                    # (BB, D)
    g_rep = jnp.dot(g, t_rep_ref[...], preferred_element_type=jnp.float32)
    x_til = jnp.dot(X, t_til_ref[...], preferred_element_type=jnp.float32)
    rest = jnp.dot(gh, s_gh_ref[...], preferred_element_type=jnp.float32)
    js = g_rep * x_til + rest + b2row_ref[...]
    js_ref[...] = js.astype(js_ref.dtype)


def parallel_jacobian(X, W1, b1, W2, b2, *, output=0, mxu_dtype=jnp.float32,
                      block_b=None, block_p=None, interpret=False):
    """Parallel_Jacobian.forward for a 2-layer tanh MLP: returns (Js, fs)."""
    B, D = X.shape
    H = W1.shape[0]
    C = W2.shape[0]
    P = H * D + H + C * H + C              # model_dim
    P_pad = _round_up(P, 128)              # lane-dense, unmasked Js stores

    auto_bb, auto_bp = _pick_tiling(B, D, H, C, P_pad)
    if block_b is None:
        block_b = auto_bb
    if block_p is None:
        block_p = auto_bp
    assert block_b % 8 == 0, "batch block must be sublane-aligned"
    assert block_p % 128 == 0 and P_pad % block_p == 0

    B_pad = _round_up(B, block_b)
    Xp = X if B_pad == B else jnp.pad(X, ((0, B_pad - B), (0, 0)))

    b1_2d = b1.reshape(1, H)
    b2_2d = b2.reshape(1, C)
    t_rep, t_til, s_gh, b2row = _placement_matrices(
        D, H, C, P_pad, int(output), mxu_dtype)

    grid = (B_pad // block_b, P_pad // block_p)
    kernel = functools.partial(_jacobian_kernel, out_idx=int(output), H=H)

    vmem_limit = int(min(max(2 * _vmem_bytes(block_b, block_p, D, H, C),
                             32 * 1024 * 1024), 100 * 1024 * 1024))

    Js, fs = pl.pallas_call(
        kernel,
        out_shape=(jax.ShapeDtypeStruct((B_pad, P_pad), jnp.float32),
                   jax.ShapeDtypeStruct((B_pad, C), jnp.float32)),
        grid_spec=pltpu.PrefetchScalarGridSpec(
            num_scalar_prefetch=0,
            grid=grid,
            in_specs=[
                pl.BlockSpec((block_b, D), lambda i, j: (i, 0)),        # X block
                pl.BlockSpec((H, D), lambda i, j: (0, 0)),              # W1 (broadcast)
                pl.BlockSpec((1, H), lambda i, j: (0, 0)),              # b1
                pl.BlockSpec((C, H), lambda i, j: (0, 0)),              # W2
                pl.BlockSpec((1, C), lambda i, j: (0, 0)),              # b2
                pl.BlockSpec((H, block_p), lambda i, j: (0, j)),        # T_rep tile
                pl.BlockSpec((D, block_p), lambda i, j: (0, j)),        # T_til tile
                pl.BlockSpec((2 * H, block_p), lambda i, j: (0, j)),    # fused [b1|W2] tile
                pl.BlockSpec((1, block_p), lambda i, j: (0, j)),        # b2 one-hot row
            ],
            out_specs=[
                pl.BlockSpec((block_b, block_p), lambda i, j: (i, j)),  # Js block
                pl.BlockSpec((block_b, C), lambda i, j: (i, 0)),        # fs block
            ],
            scratch_shapes=[pltpu.VMEM((block_b, 2 * H), jnp.float32)],  # [g | h]
        ),
        compiler_params=pltpu.CompilerParams(
            dimension_semantics=("parallel", "arbitrary"),
            vmem_limit_bytes=vmem_limit),
        interpret=interpret,
    )(Xp, W1, b1_2d, W2, b2_2d, t_rep, t_til, s_gh, b2row)

    return Js[:B, :P], fs[:B]


if __name__ == "__main__":
    key = jax.random.PRNGKey(0)
    kx, k1, k2, k3, k4 = jax.random.split(key, 5)

    B, D, H, C = 16, 16, 32, 4        # small shapes; model_dim P = 676 (padded to 768)
    output = 0

    X = jax.random.normal(kx, (B, D), dtype=jnp.float32)
    W1 = jax.random.normal(k1, (H, D), dtype=jnp.float32) / np.sqrt(D)
    b1 = 0.1 * jax.random.normal(k2, (H,), dtype=jnp.float32)
    W2 = jax.random.normal(k3, (C, H), dtype=jnp.float32) / np.sqrt(H)
    b2 = 0.1 * jax.random.normal(k4, (C,), dtype=jnp.float32)

    fn = jax.jit(functools.partial(parallel_jacobian, output=output))
    Js, fs = fn(X, W1, b1, W2, b2)
    Js = jax.block_until_ready(Js)
    fs = jax.block_until_ready(fs)

    # ---- reference via plain-JAX autodiff (independent of the kernel) --------
    def model_fn(params, x):
        w1, bb1, w2, bb2 = params
        return w2 @ jnp.tanh(w1 @ x + bb1) + bb2

    params = (W1, b1, W2, b2)
    grads = jax.vmap(
        lambda x: jax.grad(lambda p, xx: model_fn(p, xx)[output])(params, x))(X)
    gW1, gb1, gW2, gb2 = grads
    Js_ref = jnp.concatenate(
        [gW1.reshape(B, -1), gb1, gW2.reshape(B, -1), gb2], axis=1)
    fs_ref = jax.vmap(lambda x: model_fn(params, x))(X)

    P = H * D + H + C * H + C
    assert Js.shape == (B, P) and fs.shape == (B, C)
    assert bool(jnp.all(jnp.isfinite(Js)))
    assert np.allclose(np.asarray(fs), np.asarray(fs_ref), rtol=2e-2, atol=2e-2)
    assert np.allclose(np.asarray(Js), np.asarray(Js_ref), rtol=2e-2, atol=2e-2)

    print("KERNEL_OK")
</pallas_src>

<mosaic_0001>
module attributes {stable_mosaic.version = 11 : i64} {
  func.func @_jacobian_kernel(%arg0: i32, %arg1: i32, %arg2: memref<8x16xf32, #tpu.memory_space<vmem>>, %arg3: memref<32x16xf32, #tpu.memory_space<vmem>>, %arg4: memref<1x32xf32, #tpu.memory_space<vmem>>, %arg5: memref<4x32xf32, #tpu.memory_space<vmem>>, %arg6: memref<1x4xf32, #tpu.memory_space<vmem>>, %arg7: memref<32x768xf32, #tpu.memory_space<vmem>>, %arg8: memref<16x768xf32, #tpu.memory_space<vmem>>, %arg9: memref<64x768xf32, #tpu.memory_space<vmem>>, %arg10: memref<1x768xf32, #tpu.memory_space<vmem>>, %arg11: memref<8x768xf32, #tpu.memory_space<vmem>>, %arg12: memref<8x4xf32, #tpu.memory_space<vmem>>, %arg13: memref<8x64xf32, #tpu.memory_space<vmem>>) attributes {dimension_semantics = [#tpu.dimension_semantics<parallel>, #tpu.dimension_semantics<arbitrary>], iteration_bounds = array<i64: 2, 1>, scalar_prefetch = 0 : i64, scratch_operands = 1 : i64, tpu.core_type = #tpu.core_type<tc>, window_params = [{transform_indices = @transform_0, window_bounds = array<i64: 8, 16>}, {pipeline_mode = #tpu.pipeline_mode<synchronous>, transform_indices = @transform_1, window_bounds = array<i64: 32, 16>}, {pipeline_mode = #tpu.pipeline_mode<synchronous>, transform_indices = @transform_2, window_bounds = array<i64: 1, 32>}, {pipeline_mode = #tpu.pipeline_mode<synchronous>, transform_indices = @transform_3, window_bounds = array<i64: 4, 32>}, {pipeline_mode = #tpu.pipeline_mode<synchronous>, transform_indices = @transform_4, window_bounds = array<i64: 1, 4>}, {transform_indices = @transform_5, window_bounds = array<i64: 32, 768>}, {transform_indices = @transform_6, window_bounds = array<i64: 16, 768>}, {transform_indices = @transform_7, window_bounds = array<i64: 64, 768>}, {transform_indices = @transform_8, window_bounds = array<i64: 1, 768>}, {transform_indices = @transform_9, window_bounds = array<i64: 8, 768>}, {transform_indices = @transform_10, window_bounds = array<i64: 8, 4>}]} {
    %c0_i32 = arith.constant 0 : i32
    %0 = arith.cmpi eq, %arg1, %c0_i32 : i32
    %1 = arith.extui %0 : i1 to i32
    %c0_i32_0 = arith.constant 0 : i32
    %2 = arith.cmpi ne, %1, %c0_i32_0 : i32
    scf.if %2 {
      %c0_18 = arith.constant 0 : index
      %c0_19 = arith.constant 0 : index
      %18 = vector.load %arg2[%c0_18, %c0_19] : memref<8x16xf32, #tpu.memory_space<vmem>>, vector<8x16xf32>
      %c0_20 = arith.constant 0 : index
      %c0_21 = arith.constant 0 : index
      %19 = vector.load %arg3[%c0_20, %c0_21] : memref<32x16xf32, #tpu.memory_space<vmem>>, vector<32x16xf32>
      %c0_22 = arith.constant 0 : index
      %c0_23 = arith.constant 0 : index
      %20 = vector.load %arg4[%c0_22, %c0_23] : memref<1x32xf32, #tpu.memory_space<vmem>>, vector<1x32xf32>
      %c0_24 = arith.constant 0 : index
      %c0_25 = arith.constant 0 : index
      %21 = vector.load %arg5[%c0_24, %c0_25] : memref<4x32xf32, #tpu.memory_space<vmem>>, vector<4x32xf32>
      %c0_26 = arith.constant 0 : index
      %c0_27 = arith.constant 0 : index
      %22 = vector.load %arg6[%c0_26, %c0_27] : memref<1x4xf32, #tpu.memory_space<vmem>>, vector<1x4xf32>
      %cst_28 = arith.constant dense<0.000000e+00> : vector<8x32xf32>
      %23 = tpu.matmul %18, %19, %cst_28 {dimension_numbers = #tpu.dot_dimension_numbers<[1], [1], [0], [0], [0, 0, 1, 0], [], []>} : vector<8x16xf32>, vector<32x16xf32>, vector<8x32xf32> -> vector<8x32xf32>
      %24 = vector.broadcast %20 : vector<1x32xf32> to vector<8x32xf32>
      %25 = arith.addf %23, %24 : vector<8x32xf32>
      %26 = math.tanh %25 : vector<8x32xf32>
      %cst_29 = arith.constant dense<0.000000e+00> : vector<8x4xf32>
      %27 = tpu.matmul %26, %21, %cst_29 {dimension_numbers = #tpu.dot_dimension_numbers<[1], [1], [0], [0], [0, 0, 1, 0], [], []>} : vector<8x32xf32>, vector<4x32xf32>, vector<8x4xf32> -> vector<8x4xf32>
      %28 = vector.broadcast %22 : vector<1x4xf32> to vector<8x4xf32>
      %29 = arith.addf %27, %28 : vector<8x4xf32>
      %c0_30 = arith.constant 0 : index
      %c0_31 = arith.constant 0 : index
      %30 = vector.load %arg12[%c0_30, %c0_31] : memref<8x4xf32, #tpu.memory_space<vmem>>, vector<8x4xf32>
      tpu.vector_store %arg12[%c0_30, %c0_31], %29 {strides = array<i32>} : memref<8x4xf32, #tpu.memory_space<vmem>>, vector<8x4xf32>,
      %31 = arith.mulf %26, %26 : vector<8x32xf32>
      %cst_32 = arith.constant 1.000000e+00 : f32
      %32 = vector.broadcast %cst_32 : f32 to vector<8x32xf32>
      %33 = arith.subf %32, %31 : vector<8x32xf32>
      %34 = vector.extract_strided_slice %21 {offsets = [0, 0], sizes = [1, 32], strides = [1, 1]} : vector<4x32xf32> to vector<1x32xf32>
      %35 = vector.broadcast %34 : vector<1x32xf32> to vector<8x32xf32>
      %36 = arith.mulf %33, %35 : vector<8x32xf32>
      %37 = tpu.concatenate %36, %26 in 1 : vector<8x32xf32>, vector<8x32xf32> -> vector<8x64xf32>
      %c0_33 = arith.constant 0 : index
      %c0_34 = arith.constant 0 : index
      %38 = vector.load %arg13[%c0_33, %c0_34] : memref<8x64xf32, #tpu.memory_space<vmem>>, vector<8x64xf32>
      tpu.vector_store %arg13[%c0_33, %c0_34], %37 {strides = array<i32>} : memref<8x64xf32, #tpu.memory_space<vmem>>, vector<8x64xf32>,
    } else {
    }
    %c0 = arith.constant 0 : index
    %c0_1 = arith.constant 0 : index
    %3 = vector.load %arg13[%c0, %c0_1] : memref<8x64xf32, #tpu.memory_space<vmem>>, vector<8x64xf32>
    %c0_2 = arith.constant 0 : index
    %c0_3 = arith.constant 0 : index
    %4 = vector.load %arg13[%c0_2, %c0_3] : memref<8x64xf32, #tpu.memory_space<vmem>>, vector<8x32xf32>
    %c0_4 = arith.constant 0 : index
    %c0_5 = arith.constant 0 : index
    %5 = vector.load %arg2[%c0_4, %c0_5] : memref<8x16xf32, #tpu.memory_space<vmem>>, vector<8x16xf32>
    %c0_6 = arith.constant 0 : index
    %c0_7 = arith.constant 0 : index
    %6 = vector.load %arg7[%c0_6, %c0_7] : memref<32x768xf32, #tpu.memory_space<vmem>>, vector<32x768xf32>
    %cst = arith.constant dense<0.000000e+00> : vector<8x768xf32>
    %7 = tpu.matmul %4, %6, %cst {dimension_numbers = #tpu.dot_dimension_numbers<[1], [0], [0], [1], [0, 0, 1, 1], [], []>} : vector<8x32xf32>, vector<32x768xf32>, vector<8x768xf32> -> vector<8x768xf32>
    %c0_8 = arith.constant 0 : index
    %c0_9 = arith.constant 0 : index
    %8 = vector.load %arg8[%c0_8, %c0_9] : memref<16x768xf32, #tpu.memory_space<vmem>>, vector<16x768xf32>
    %cst_10 = arith.constant dense<0.000000e+00> : vector<8x768xf32>
    %9 = tpu.matmul %5, %8, %cst_10 {dimension_numbers = #tpu.dot_dimension_numbers<[1], [0], [0], [1], [0, 0, 1, 1], [], []>} : vector<8x16xf32>, vector<16x768xf32>, vector<8x768xf32> -> vector<8x768xf32>
    %c0_11 = arith.constant 0 : index
    %c0_12 = arith.constant 0 : index
    %10 = vector.load %arg9[%c0_11, %c0_12] : memref<64x768xf32, #tpu.memory_space<vmem>>, vector<64x768xf32>
    %cst_13 = arith.constant dense<0.000000e+00> : vector<8x768xf32>
    %11 = tpu.matmul %3, %10, %cst_13 {dimension_numbers = #tpu.dot_dimension_numbers<[1], [0], [0], [1], [0, 0, 1, 1], [], []>} : vector<8x64xf32>, vector<64x768xf32>, vector<8x768xf32> -> vector<8x768xf32>
    %12 = arith.mulf %7, %9 : vector<8x768xf32>
    %13 = arith.addf %12, %11 : vector<8x768xf32>
    %c0_14 = arith.constant 0 : index
    %c0_15 = arith.constant 0 : index
    %14 = vector.load %arg10[%c0_14, %c0_15] : memref<1x768xf32, #tpu.memory_space<vmem>>, vector<1x768xf32>
    %15 = vector.broadcast %14 : vector<1x768xf32> to vector<8x768xf32>
    %16 = arith.addf %13, %15 : vector<8x768xf32>
    %c0_16 = arith.constant 0 : index
    %c0_17 = arith.constant 0 : index
    %17 = vector.load %arg11[%c0_16, %c0_17] : memref<8x768xf32, #tpu.memory_space<vmem>>, vector<8x768xf32>
    tpu.vector_store %arg11[%c0_16, %c0_17], %16 {strides = array<i32>} : memref<8x768xf32, #tpu.memory_space<vmem>>, vector<8x768xf32>,
    return
  }
  func.func @transform_0(%arg0: i32, %arg1: i32) -> (i32, i32) {
    %c0_i32 = arith.constant 0 : i32
    %c0_i32_0 = arith.constant 0 : i32
    return %arg0, %c0_i32 : i32, i32
  }
  func.func @transform_1(%arg0: i32, %arg1: i32) -> (i32, i32) {
    %c0_i32 = arith.constant 0 : i32
    %c0_i32_0 = arith.constant 0 : i32
    %c0_i32_1 = arith.constant 0 : i32
    return %c0_i32, %c0_i32_0 : i32, i32
  }
  func.func @transform_2(%arg0: i32, %arg1: i32) -> (i32, i32) {
    %c0_i32 = arith.constant 0 : i32
    %c0_i32_0 = arith.constant 0 : i32
    %c0_i32_1 = arith.constant 0 : i32
    return %c0_i32, %c0_i32_0 : i32, i32
  }
  func.func @transform_3(%arg0: i32, %arg1: i32) -> (i32, i32) {
    %c0_i32 = arith.constant 0 : i32
    %c0_i32_0 = arith.constant 0 : i32
    %c0_i32_1 = arith.constant 0 : i32
    return %c0_i32, %c0_i32_0 : i32, i32
  }
  func.func @transform_4(%arg0: i32, %arg1: i32) -> (i32, i32) {
    %c0_i32 = arith.constant 0 : i32
    %c0_i32_0 = arith.constant 0 : i32
    %c0_i32_1 = arith.constant 0 : i32
    return %c0_i32, %c0_i32_0 : i32, i32
  }
  func.func @transform_5(%arg0: i32, %arg1: i32) -> (i32, i32) {
    %c0_i32 = arith.constant 0 : i32
    %c0_i32_0 = arith.constant 0 : i32
    return %c0_i32, %arg1 : i32, i32
  }
  func.func @transform_6(%arg0: i32, %arg1: i32) -> (i32, i32) {
    %c0_i32 = arith.constant 0 : i32
    %c0_i32_0 = arith.constant 0 : i32
    return %c0_i32, %arg1 : i32, i32
  }
  func.func @transform_7(%arg0: i32, %arg1: i32) -> (i32, i32) {
    %c0_i32 = arith.constant 0 : i32
    %c0_i32_0 = arith.constant 0 : i32
    return %c0_i32, %arg1 : i32, i32
  }
  func.func @transform_8(%arg0: i32, %arg1: i32) -> (i32, i32) {
    %c0_i32 = arith.constant 0 : i32
    %c0_i32_0 = arith.constant 0 : i32
    return %c0_i32, %arg1 : i32, i32
  }
  func.func @transform_9(%arg0: i32, %arg1: i32) -> (i32, i32) {
    %c0_i32 = arith.constant 0 : i32
    return %arg0, %arg1 : i32, i32
  }
  func.func @transform_10(%arg0: i32, %arg1: i32) -> (i32, i32) {
    %c0_i32 = arith.constant 0 : i32
    %c0_i32_0 = arith.constant 0 : i32
    return %arg0, %c0_i32 : i32, i32
  }
}

</mosaic_0001>

<llo_original>
// kernel: parallel_jacobian.1
$region0: #{parallel_jacobian.1}
  #allocation0 [shape = 'u32[]', space=smem, size = 0x4, offset = 0x4, fixed_abs, tag = 'smem constant byte address 0x4 - core index']
  #allocation1 [shape = 'u32[144,128]{1,0:T(1,128)}', space=vmem, size = 0x12000, scoped, tag = 'internal scratch']
  #allocation2 [shape = 'f32[8,64]{1,0:T(8,128)}', space=vmem, size = 0x1000, scoped, tag = 'scratch operand']
  %s0 = inlined_call_operand.vmem [shape: f32[16,16], index: 0, kind: input, shape index: {}]
  %s1 = inlined_call_operand.vmem [shape: f32[32,16], index: 1, kind: input, shape index: {}]
  %s2 = inlined_call_operand.vmem [shape: f32[1,32], index: 2, kind: input, shape index: {}]
  %s3 = inlined_call_operand.vmem [shape: f32[4,32], index: 3, kind: input, shape index: {}]
  %s4 = inlined_call_operand.vmem [shape: f32[1,4], index: 4, kind: input, shape index: {}]
  %s5 = inlined_call_operand.vmem [shape: f32[32,768], index: 5, kind: input, shape index: {}]
  %s6 = inlined_call_operand.vmem [shape: f32[16,768], index: 6, kind: input, shape index: {}]
  %s7 = inlined_call_operand.vmem [shape: f32[64,768], index: 7, kind: input, shape index: {}]
  %s8 = inlined_call_operand.vmem [shape: f32[1,768], index: 8, kind: input, shape index: {}]
  %s9 = inlined_call_operand.hbm [shape: f32[16,768], index: 9, kind: output, shape index: {0}]
  %s10 = inlined_call_operand.vmem [shape: f32[16,4], index: 10, kind: output, shape index: {1}]
  %11 = xla_tuple %s9, %s10
  %s12 = sld [smem:[#allocation0]]
  $region81: #{parallel_jacobian.1} parent=0
    _
  %s14 = ssub.s32 1, %s12
  %s15 = scalar_select 0, %s14, %s12
  $region1: #{parallel_jacobian.1} parent=0
    #allocation3 [shape = 'u8[49152]{0}', space=vmem, size = 0xc000, scoped, tag = 'output window, operand 0']
    #allocation4 [shape = 's32[2]{0}', space=sflag, size = 0x8, scoped, tag = 'scoped memory for parallel_jacobian.1']
    %16 = vsyncpa [#allocation4], 0
    %s17 = scalar_lea.sflag [#allocation4], 1
    %18 = vsyncpa %s17, 0
    loop: start=0, step=1, limit=4
    $region2: #{parallel_jacobian.1} parent=1 // loop_pre_header
      _
    $region3: #{parallel_jacobian.1} parent=1 // loop_header
      %s20 = sphi 0, %s24
      %p21 = scmp.ge.s32.totalorder %s20, 4
      %s27 = sphi 0, %s39
      %s28 = sphi 0, %s35
      %s29 = sphi 0, %s27
      %s30 = sphi 0, %s28
      %s31 = sphi 0, %s29
      %s32 = sphi 0, %s30
      %s42 = sphi 0, %s44
      %s45 = sphi 0, %s42
      %s46 = sphi 0, %s45
      %s62 = sphi 0, %s46
      %s66 = sphi 0, %s66
      %s68 = sphi 0, %s66
      %s69 = sphi 0, %s68
      %s83 = sphi 0, %s69
      %s87 = sphi 0, %s87
      %s89 = sphi 0, %s87
      %s90 = sphi 0, %s89
      %s104 = sphi 0, %s90
      %s108 = sphi 0, %s108
      %s110 = sphi 0, %s108
      %s111 = sphi 0, %s110
      %s125 = sphi 0, %s111
      %s129 = sphi 0, %s129
      %s131 = sphi 0, %s129
      %s132 = sphi 0, %s131
      %s146 = sphi 0, %s132
      %s152 = sphi 0, %s154
      %s155 = sphi 0, %s152
      %s156 = sphi 0, %s155
      %s172 = sphi 0, %s156
      %s178 = sphi 0, %s180
      %s181 = sphi 0, %s178
      %s182 = sphi 0, %s181
      %s198 = sphi 0, %s182
      %s204 = sphi 0, %s206
      %s207 = sphi 0, %s204
      %s208 = sphi 0, %s207
      %s224 = sphi 0, %s208
      %s230 = sphi 0, %s232
      %s233 = sphi 0, %s230
      %s234 = sphi 0, %s233
      %s250 = sphi 0, %s234
      %s258 = sphi 0, %s260
      %s261 = sphi 0, %s258
      %s262 = sphi 0, %s261
      %s278 = sphi 0, %s262
      %s284 = sphi 0, %s286
      %s287 = sphi 0, %s284
      %s288 = sphi 0, %s287
      %s304 = sphi 0, %s288
    $region4: #{parallel_jacobian.1} parent=1 // loop_header_branch
      %23 = sbr.rel (%p21) target = $region8
    $region5: #{parallel_jacobian.1} parent=1 // loop_body
      %s25 = ssub.s32 %s20, 1
      %s26 = ssub.s32 %s20, 2
      %s33 = sadd.s32 1, %s28
      %p34 = scmp.ge.s32.totalorder %s33, 1
      %s35 = scalar_select %p34, 0, %s33
      %s36 = sadd.s32 1, %s27
      %s37 = scalar_select %p34, %s36, %s27
      %p38 = scmp.ge.s32.totalorder %s37, 2
      %s39 = scalar_select %p38, 0, %s37
      %s40 = ssub.s32 %s27, %s39
      %p41 = scmp.eq.s32.totalorder %s40, 0
      %s43 = sadd.s32 %s42, 1
      %s44 = scalar_select %p41, %s42, %s43
      %p47 = pneg %p41
      %p48 = scmp.eq.s32.totalorder %s20, 1
      %p49 = por %p47, %p48
      %p50 = scmp.ne.s32.totalorder %s42, %s45
      %p51 = scmp.eq.s32.totalorder %s20, 0
      %p52 = por %p50, %p51
      %p53 = scmp.ne.s32.totalorder %s42, %s45
      %p54 = scmp.eq.s32.totalorder %s25, 1
      %p55 = por %p53, %p54
      %p56 = scmp.ne.s32.totalorder %s45, %s46
      %p57 = scmp.eq.s32.totalorder %s25, 0
      %p58 = por %p56, %p57
      %p59 = scmp.ne.s32.totalorder %s45, %s46
      %p60 = scmp.eq.s32.totalorder %s26, 1
      %p61 = por %p59, %p60
      %p63 = scmp.ne.s32.totalorder %s46, %s62
      %p64 = scmp.eq.s32.totalorder %s26, 0
      %p65 = por %p63, %p64
      %s67 = sadd.s32 %s66, 1
      %p70 = scmp.eq.s32.totalorder %s20, 1
      %p71 = scmp.ne.s32.totalorder %s66, %s68
      %p72 = scmp.eq.s32.totalorder %s20, 0
      %p73 = por %p71, %p72
      %p74 = scmp.ne.s32.totalorder %s66, %s68
      %p75 = scmp.eq.s32.totalorder %s25, 1
      %p76 = por %p74, %p75
      %p77 = scmp.ne.s32.totalorder %s68, %s69
      %p78 = scmp.eq.s32.totalorder %s25, 0
      %p79 = por %p77, %p78
      %p80 = scmp.ne.s32.totalorder %s68, %s69
      %p81 = scmp.eq.s32.totalorder %s26, 1
      %p82 = por %p80, %p81
      %p84 = scmp.ne.s32.totalorder %s69, %s83
      %p85 = scmp.eq.s32.totalorder %s26, 0
      %p86 = por %p84, %p85
      %s88 = sadd.s32 %s87, 1
      %p91 = scmp.eq.s32.totalorder %s20, 1
      %p92 = scmp.ne.s32.totalorder %s87, %s89
      %p93 = scmp.eq.s32.totalorder %s20, 0
      %p94 = por %p92, %p93
      %p95 = scmp.ne.s32.totalorder %s87, %s89
      %p96 = scmp.eq.s32.totalorder %s25, 1
      %p97 = por %p95, %p96
      %p98 = scmp.ne.s32.totalorder %s89, %s90
      %p99 = scmp.eq.s32.totalorder %s25, 0
      %p100 = por %p98, %p99
      %p101 = scmp.ne.s32.totalorder %s89, %s90
      %p102 = scmp.eq.s32.totalorder %s26, 1
      %p103 = por %p101, %p102
      %p105 = scmp.ne.s32.totalorder %s90, %s104
      %p106 = scmp.eq.s32.totalorder %s26, 0
      %p107 = por %p105, %p106
      %s109 = sadd.s32 %s108, 1
      %p112 = scmp.eq.s32.totalorder %s20, 1
      %p113 = scmp.ne.s32.totalorder %s108, %s110
      %p114 = scmp.eq.s32.totalorder %s20, 0
      %p115 = por %p113, %p114
      %p116 = scmp.ne.s32.totalorder %s108, %s110
      %p117 = scmp.eq.s32.totalorder %s25, 1
      %p118 = por %p116, %p117
      %p119 = scmp.ne.s32.totalorder %s110, %s111
      %p120 = scmp.eq.s32.totalorder %s25, 0
      %p121 = por %p119, %p120
      %p122 = scmp.ne.s32.totalorder %s110, %s111
      %p123 = scmp.eq.s32.totalorder %s26, 1
      %p124 = por %p122, %p123
      %p126 = scmp.ne.s32.totalorder %s111, %s125
      %p127 = scmp.eq.s32.totalorder %s26, 0
      %p128 = por %p126, %p127
      %s130 = sadd.s32 %s129, 1
      %p133 = scmp.eq.s32.totalorder %s20, 1
      %p134 = scmp.ne.s32.totalorder %s129, %s131
      %p135 = scmp.eq.s32.totalorder %s20, 0
      %p136 = por %p134, %p135
      %p137 = scmp.ne.s32.totalorder %s129, %s131
      %p138 = scmp.eq.s32.totalorder %s25, 1
      %p139 = por %p137, %p138
      %p140 = scmp.ne.s32.totalorder %s131, %s132
      %p141 = scmp.eq.s32.totalorder %s25, 0
      %p142 = por %p140, %p141
      %p143 = scmp.ne.s32.totalorder %s131, %s132
      %p144 = scmp.eq.s32.totalorder %s26, 1
      %p145 = por %p143, %p144
      %p147 = scmp.ne.s32.totalorder %s132, %s146
      %p148 = scmp.eq.s32.totalorder %s26, 0
      %p149 = por %p147, %p148
      %s150 = ssub.s32 %s28, %s35
      %p151 = scmp.eq.s32.totalorder %s150, 0
      %s153 = sadd.s32 %s152, 1
      %s154 = scalar_select %p151, %s152, %s153
      %p157 = pneg %p151
      %p158 = scmp.eq.s32.totalorder %s20, 1
      %p159 = por %p157, %p158
      %p160 = scmp.ne.s32.totalorder %s152, %s155
      %p161 = scmp.eq.s32.totalorder %s20, 0
      %p162 = por %p160, %p161
      %p163 = scmp.ne.s32.totalorder %s152, %s155
      %p164 = scmp.eq.s32.totalorder %s25, 1
      %p165 = por %p163, %p164
      %p166 = scmp.ne.s32.totalorder %s155, %s156
      %p167 = scmp.eq.s32.totalorder %s25, 0
      %p168 = por %p166, %p167
      %p169 = scmp.ne.s32.totalorder %s155, %s156
      %p170 = scmp.eq.s32.totalorder %s26, 1
      %p171 = por %p169, %p170
      %p173 = scmp.ne.s32.totalorder %s156, %s172
      %p174 = scmp.eq.s32.totalorder %s26, 0
      %p175 = por %p173, %p174
      %s176 = ssub.s32 %s28, %s35
      %p177 = scmp.eq.s32.totalorder %s176, 0
      %s179 = sadd.s32 %s178, 1
      %s180 = scalar_select %p177, %s178, %s179
      %p183 = pneg %p177
      %p184 = scmp.eq.s32.totalorder %s20, 1
      %p185 = por %p183, %p184
      %p186 = scmp.ne.s32.totalorder %s178, %s181
      %p187 = scmp.eq.s32.totalorder %s20, 0
      %p188 = por %p186, %p187
      %p189 = scmp.ne.s32.totalorder %s178, %s181
      %p190 = scmp.eq.s32.totalorder %s25, 1
      %p191 = por %p189, %p190
      %p192 = scmp.ne.s32.totalorder %s181, %s182
      %p193 = scmp.eq.s32.totalorder %s25, 0
      %p194 = por %p192, %p193
      %p195 = scmp.ne.s32.totalorder %s181, %s182
      %p196 = scmp.eq.s32.totalorder %s26, 1
      %p197 = por %p195, %p196
      %p199 = scmp.ne.s32.totalorder %s182, %s198
      %p200 = scmp.eq.s32.totalorder %s26, 0
      %p201 = por %p199, %p200
      %s202 = ssub.s32 %s28, %s35
      %p203 = scmp.eq.s32.totalorder %s202, 0
      %s205 = sadd.s32 %s204, 1
      %s206 = scalar_select %p203, %s204, %s205
      %p209 = pneg %p203
      %p210 = scmp.eq.s32.totalorder %s20, 1
      %p211 = por %p209, %p210
      %p212 = scmp.ne.s32.totalorder %s204, %s207
      %p213 = scmp.eq.s32.totalorder %s20, 0
      %p214 = por %p212, %p213
      %p215 = scmp.ne.s32.totalorder %s204, %s207
      %p216 = scmp.eq.s32.totalorder %s25, 1
      %p217 = por %p215, %p216
      %p218 = scmp.ne.s32.totalorder %s207, %s208
      %p219 = scmp.eq.s32.totalorder %s25, 0
      %p220 = por %p218, %p219
      %p221 = scmp.ne.s32.totalorder %s207, %s208
      %p222 = scmp.eq.s32.totalorder %s26, 1
      %p223 = por %p221, %p222
      %p225 = scmp.ne.s32.totalorder %s208, %s224
      %p226 = scmp.eq.s32.totalorder %s26, 0
      %p227 = por %p225, %p226
      %s228 = ssub.s32 %s28, %s35
      %p229 = scmp.eq.s32.totalorder %s228, 0
      %s231 = sadd.s32 %s230, 1
      %s232 = scalar_select %p229, %s230, %s231
      %p235 = pneg %p229
      %p236 = scmp.eq.s32.totalorder %s20, 1
      %p237 = por %p235, %p236
      %p238 = scmp.ne.s32.totalorder %s230, %s233
      %p239 = scmp.eq.s32.totalorder %s20, 0
      %p240 = por %p238, %p239
      %p241 = scmp.ne.s32.totalorder %s230, %s233
      %p242 = scmp.eq.s32.totalorder %s25, 1
      %p243 = por %p241, %p242
      %p244 = scmp.ne.s32.totalorder %s233, %s234
      %p245 = scmp.eq.s32.totalorder %s25, 0
      %p246 = por %p244, %p245
      %p247 = scmp.ne.s32.totalorder %s233, %s234
      %p248 = scmp.eq.s32.totalorder %s26, 1
      %p249 = por %p247, %p248
      %p251 = scmp.ne.s32.totalorder %s234, %s250
      %p252 = scmp.eq.s32.totalorder %s26, 0
      %p253 = por %p251, %p252
      %s254 = ssub.s32 %s27, %s39
      %s255 = ssub.s32 %s28, %s35
      %s256 = sor.u32 %s254, %s255
      %p257 = scmp.eq.s32.totalorder %s256, 0
      %s259 = sadd.s32 %s258, 1
      %s260 = scalar_select %p257, %s258, %s259
      %p263 = pneg %p257
      %p264 = scmp.eq.s32.totalorder %s20, 1
      %p265 = por %p263, %p264
      %p266 = scmp.ne.s32.totalorder %s258, %s261
      %p267 = scmp.eq.s32.totalorder %s20, 0
      %p268 = por %p266, %p267
      %p269 = scmp.ne.s32.totalorder %s258, %s261
      %p270 = scmp.eq.s32.totalorder %s25, 1
      %p271 = por %p269, %p270
      %p272 = scmp.ne.s32.totalorder %s261, %s262
      %p273 = scmp.eq.s32.totalorder %s25, 0
      %p274 = por %p272, %p273
      %p275 = scmp.ne.s32.totalorder %s261, %s262
      %p276 = scmp.eq.s32.totalorder %s26, 1
      %p277 = por %p275, %p276
      %p279 = scmp.ne.s32.totalorder %s262, %s278
      %p280 = scmp.eq.s32.totalorder %s26, 0
      %p281 = por %p279, %p280
      %s282 = ssub.s32 %s27, %s39
      %p283 = scmp.eq.s32.totalorder %s282, 0
      %s285 = sadd.s32 %s284, 1
      %s286 = scalar_select %p283, %s284, %s285
      %p289 = pneg %p283
      %p290 = scmp.eq.s32.totalorder %s20, 1
      %p291 = por %p289, %p290
      %p292 = scmp.ne.s32.totalorder %s284, %s287
      %p293 = scmp.eq.s32.totalorder %s20, 0
      %p294 = por %p292, %p293
      %p295 = scmp.ne.s32.totalorder %s284, %s287
      %p296 = scmp.eq.s32.totalorder %s25, 1
      %p297 = por %p295, %p296
      %p298 = scmp.ne.s32.totalorder %s287, %s288
      %p299 = scmp.eq.s32.totalorder %s25, 0
      %p300 = por %p298, %p299
      %p301 = scmp.ne.s32.totalorder %s287, %s288
      %p302 = scmp.eq.s32.totalorder %s26, 1
      %p303 = por %p301, %p302
      %p305 = scmp.ne.s32.totalorder %s288, %s304
      %p306 = scmp.eq.s32.totalorder %s26, 0
      %p307 = por %p305, %p306
      %p308 = scmp.le.s32.totalorder 1, %s20
      %p309 = scmp.lt.s32.totalorder %s20, 3
      %p310 = pnand %p308, %p309
      %p311 = pneg %p310
      // Predicated region
      $region9: #{parallel_jacobian.1} parent=5 // pred_check
        _
      $region10: #{parallel_jacobian.1} parent=5 // pred_check_branch
        %313 = sbr.rel (%p310) target = $region12
      $region11: #{parallel_jacobian.1} parent=5 // pred_region
        %s314 = ssub.s32 %s20, 1
        // Predicated region
        $region13: #{parallel_jacobian.1} parent=11 // pred_check
          %p315 = pneg %p79
        $region14: #{parallel_jacobian.1} parent=11 // pred_check_branch
          %317 = sbr.rel (%p315) target = $region16
        $region15: #{parallel_jacobian.1} parent=11 // pred_region
          _
        $region16: #{parallel_jacobian.1} parent=11 // pred_fallthru
          _
        // Predicated region
        $region17: #{parallel_jacobian.1} parent=11 // pred_check
          %p318 = pneg %p100
        $region18: #{parallel_jacobian.1} parent=11 // pred_check_branch
          %320 = sbr.rel (%p318) target = $region20
        $region19: #{parallel_jacobian.1} parent=11 // pred_region
          _
        $region20: #{parallel_jacobian.1} parent=11 // pred_fallthru
          _
        // Predicated region
        $region21: #{parallel_jacobian.1} parent=11 // pred_check
          %p321 = pneg %p121
        $region22: #{parallel_jacobian.1} parent=11 // pred_check_branch
          %323 = sbr.rel (%p321) target = $region24
        $region23: #{parallel_jacobian.1} parent=11 // pred_region
          _
        $region24: #{parallel_jacobian.1} parent=11 // pred_fallthru
          _
        // Predicated region
        $region25: #{parallel_jacobian.1} parent=11 // pred_check
          %p324 = pneg %p142
        $region26: #{parallel_jacobian.1} parent=11 // pred_check_branch
          %326 = sbr.rel (%p324) target = $region28
        $region27: #{parallel_jacobian.1} parent=11 // pred_region
          _
        $region28: #{parallel_jacobian.1} parent=11 // pred_fallthru
          _
        // Predicated region
        $region29: #{parallel_jacobian.1} parent=11 // pred_check
          %p327 = pneg %p168
        $region30: #{parallel_jacobian.1} parent=11 // pred_check_branch
          %329 = sbr.rel (%p327) target = $region32
        $region31: #{parallel_jacobian.1} parent=11 // pred_region
          %s330 = smul.u32 6, %s30
          %p331 = scmp.lt.s32.totalorder %s330, 5
          %s332 = scalar_select %p331, %s330, 5
          %s333 = smul.addr %s332, 8
          %s334 = scalar_lea.vmem %s5, %s333
          %s335 = smul.u32 6, %s30
        $region32: #{parallel_jacobian.1} parent=11 // pred_fallthru
          _
        // Predicated region
        $region33: #{parallel_jacobian.1} parent=11 // pred_check
          %p336 = pneg %p194
        $region34: #{parallel_jacobian.1} parent=11 // pred_check_branch
          %338 = sbr.rel (%p336) target = $region36
        $region35: #{parallel_jacobian.1} parent=11 // pred_region
          %s339 = smul.u32 6, %s30
          %p340 = scmp.lt.s32.totalorder %s339, 5
          %s341 = scalar_select %p340, %s339, 5
          %s342 = smul.addr %s341, 8
          %s343 = scalar_lea.vmem %s6, %s342
          %s344 = smul.u32 6, %s30
        $region36: #{parallel_jacobian.1} parent=11 // pred_fallthru
          _
        // Predicated region
        $region37: #{parallel_jacobian.1} parent=11 // pred_check
          %p345 = pneg %p220
        $region38: #{parallel_jacobian.1} parent=11 // pred_check_branch
          %347 = sbr.rel (%p345) target = $region40
        $region39: #{parallel_jacobian.1} parent=11 // pred_region
          %s348 = smul.u32 6, %s30
          %p349 = scmp.lt.s32.totalorder %s348, 5
          %s350 = scalar_select %p349, %s348, 5
          %s351 = smul.addr %s350, 8
          %s352 = scalar_lea.vmem %s7, %s351
          %s353 = smul.u32 6, %s30
        $region40: #{parallel_jacobian.1} parent=11 // pred_fallthru
          _
        // Predicated region
        $region41: #{parallel_jacobian.1} parent=11 // pred_check
          %p354 = pneg %p246
        $region42: #{parallel_jacobian.1} parent=11 // pred_check_branch
          %356 = sbr.rel (%p354) target = $region44
        $region43: #{parallel_jacobian.1} parent=11 // pred_region
          %s357 = smul.u32 6, %s30
          %p358 = scmp.lt.s32.totalorder %s357, 5
          %s359 = scalar_select %p358, %s357, 5
          %s360 = scalar_lea.vmem %s8, %s359
          %s361 = smul.u32 6, %s30
        $region44: #{parallel_jacobian.1} parent=11 // pred_fallthru
          _
      $region12: #{parallel_jacobian.1} parent=5 // pred_fallthru
        _
      %p362 = scmp.lt.s32.totalorder %s20, 2
      // Predicated region
      $region45: #{parallel_jacobian.1} parent=5 // pred_check
        %p363 = pneg %p362
      $region46: #{parallel_jacobian.1} parent=5 // pred_check_branch
        %365 = sbr.rel (%p363) target = $region48
      $region47: #{parallel_jacobian.1} parent=5 // pred_region
        // Predicated region
        $region49: #{parallel_jacobian.1} parent=47 // pred_check
          %p366 = pneg %p52
        $region50: #{parallel_jacobian.1} parent=47 // pred_check_branch
          %368 = sbr.rel (%p366) target = $region52
        $region51: #{parallel_jacobian.1} parent=47 // pred_region
          %p369 = scmp.lt.s32.totalorder %s27, 1
          %s370 = scalar_select %p369, %s27, 1
          %s371 = smul.addr %s370, 8
          %s372 = scalar_lea.vmem %s0, %s371
        $region52: #{parallel_jacobian.1} parent=47 // pred_fallthru
          _
      $region48: #{parallel_jacobian.1} parent=5 // pred_fallthru
        _
      %p373 = scmp.le.s32.totalorder 1, %s20
      %p374 = scmp.lt.s32.totalorder %s20, 3
      %p375 = pnand %p373, %p374
      %p376 = pneg %p375
      // Predicated region
      $region53: #{parallel_jacobian.1} parent=5 // pred_check
        _
      $region54: #{parallel_jacobian.1} parent=5 // pred_check_branch
        %378 = sbr.rel (%p375) target = $region56
      $region55: #{parallel_jacobian.1} parent=5 // pred_region
        %s379 = ssub.s32 %s20, 1
        %p380 = scmp.lt.s32.totalorder %s29, 1
        %s381 = scalar_select %p380, %s29, 1
        %s382 = smul.addr %s381, 8
        %s383 = scalar_lea.vmem %s0, %s382
        %p384 = pneg %p58
        %p385 = pneg %p55
        %p386 = pneg %p79
        %p387 = pneg %p76
        %p388 = pneg %p100
        %p389 = pneg %p97
        %p390 = pneg %p121
        %p391 = pneg %p118
        %p392 = pneg %p142
        %p393 = pneg %p139
        %s394 = smul.u32 6, %s30
        %p395 = scmp.lt.s32.totalorder %s394, 5
        %s396 = scalar_select %p395, %s394, 5
        %s397 = smul.addr %s396, 8
        %s398 = scalar_lea.vmem %s5, %s397
        %p399 = pneg %p168
        %p400 = pneg %p165
        %s401 = smul.u32 6, %s30
        %p402 = scmp.lt.s32.totalorder %s401, 5
        %s403 = scalar_select %p402, %s401, 5
        %s404 = smul.addr %s403, 8
        %s405 = scalar_lea.vmem %s6, %s404
        %p406 = pneg %p194
        %p407 = pneg %p191
        %s408 = smul.u32 6, %s30
        %p409 = scmp.lt.s32.totalorder %s408, 5
        %s410 = scalar_select %p409, %s408, 5
        %s411 = smul.addr %s410, 8
        %s412 = scalar_lea.vmem %s7, %s411
        %p413 = pneg %p220
        %p414 = pneg %p217
        %s415 = smul.u32 6, %s30
        %p416 = scmp.lt.s32.totalorder %s415, 5
        %s417 = scalar_select %p416, %s415, 5
        %s418 = scalar_lea.vmem %s8, %s417
        %p419 = pneg %p246
        %p420 = pneg %p243
        %p421 = pneg %p274
        %p422 = pneg %p271
        %s423 = sand.u32 %s261, 1
        %s424 = scalar_lea.sflag [#allocation4], %s423
        %s425 = sand.u32 %s261, 1
        %s426 = smul.addr %s425, 48
        %s427 = scalar_lea.vmem [#allocation3], %s426
        %p428 = pneg %p300
        %p429 = pneg %p297
        %p430 = scmp.lt.s32.totalorder %s29, 1
        %s431 = scalar_select %p430, %s29, 1
        %s432 = smul.addr %s431, 8
        %s433 = scalar_lea.vmem %s10, %s432
        %p434 = scmp.lt.s32.totalorder %s29, 1
        %s435 = scalar_select %p434, %s29, 1
        %s436 = smul.addr %s435, 8
        %s437 = scalar_lea.vmem %s0, %s436
        %s438 = smul.u32 6, %s30
        %p439 = scmp.lt.s32.totalorder %s438, 5
        %s440 = scalar_select %p439, %s438, 5
        %s441 = smul.addr %s440, 8
        %s442 = scalar_lea.vmem %s5, %s441
        %s443 = smul.u32 6, %s30
        %s444 = smul.u32 6, %s30
        %p445 = scmp.lt.s32.totalorder %s444, 5
        %s446 = scalar_select %p445, %s444, 5
        %s447 = smul.addr %s446, 8
        %s448 = scalar_lea.vmem %s6, %s447
        %s449 = smul.u32 6, %s30
        %s450 = smul.u32 6, %s30
        %p451 = scmp.lt.s32.totalorder %s450, 5
        %s452 = scalar_select %p451, %s450, 5
        %s453 = smul.addr %s452, 8
        %s454 = scalar_lea.vmem %s7, %s453
        %s455 = smul.u32 6, %s30
        %s456 = smul.u32 6, %s30
        %p457 = scmp.lt.s32.totalorder %s456, 5
        %s458 = scalar_select %p457, %s456, 5
        %s459 = scalar_lea.vmem %s8, %s458
        %s460 = smul.u32 6, %s30
        %s461 = smul.u32 6, %s30
        %p462 = scmp.lt.s32.totalorder %s29, 1
        %s463 = scalar_select %p462, %s29, 1
        %s464 = smul.addr %s463, 8
        %s465 = scalar_lea.vmem %s10, %s464
        %p466 = scmp.eq.s32.totalorder %s30, 0
        // Predicated region
        $region57: #{parallel_jacobian.1} parent=55 // pred_check
          %p467 = pneg %p466
        $region58: #{parallel_jacobian.1} parent=55 // pred_check_branch
          %469 = sbr.rel (%p467) target = $region60
        $region59: #{parallel_jacobian.1} parent=55 // pred_region
          %v470 = vld [vmem:[%s437] sm:$0xff]
          %v471 = vld [vmem:[%s1] sm:$0xff]
          %v472 = vld [vmem:[%s1 + $0x8] sm:$0xff]
          %v473 = vld [vmem:[%s1 + $0x10] sm:$0xff]
          %v474 = vld [vmem:[%s1 + $0x18] sm:$0xff]
          %v475 = vld [vmem:[%s2] sm:$0x1]
          %v476 = vld [vmem:[%s3] sm:$0xf]
          %v477 = vld [vmem:[%s4] sm:$0x1]
          %v479 = vlaneseq
          %v480 = vshrl.u32 %v479, 7
          %v481 = vsub.s32 0, %v480
          %v482 = vrot.slane %v475, %v481
          %vm484 = vcmask 130048
          %v486 = vsel %vm484, %v470, 0
          %v489 = vsel %vm484, %v471, 0
          %v492 = vsel %vm484, %v472, 0
          %v495 = vsel %vm484, %v473, 0
          %v498 = vsel %vm484, %v474, 0
          %500 = vmatprep.subr.mxu0 0.0
          %501 = vmatpush1.xpose.msra.mxu0 %v489
          %502 = vmatprep.subr.mxu0 0.0
          %503 = vmatpush1.xpose.msra.mxu0 %v492
          %504 = vmatprep.subr.mxu0 0.0
          %505 = vmatpush1.xpose.msra.mxu0 %v495
          %506 = vmatprep.subr.mxu0 0.0
          %507 = vmatpush1.xpose.msra.mxu0 %v498
          %508 = vmatprep.subr.mxu0 0.0
          %509 = vmatpush1.xpose.msra.mxu0 0.0
          %510 = vmatprep.subr.mxu0 0.0
          %511 = vmatpush1.xpose.msra.mxu0 0.0
          %512 = vmatprep.subr.mxu0 0.0
          %513 = vmatpush1.xpose.msra.mxu0 0.0
          %514 = vmatprep.subr.mxu0 0.0
          %515 = vmatpush1.xpose.msra.mxu0 0.0
          %516 = vmatprep.subr.mxu0 0.0
          %517 = vmatpush1.xpose.msra.mxu0 0.0
          %518 = vmatprep.subr.mxu0 0.0
          %519 = vmatpush1.xpose.msra.mxu0 0.0
          %520 = vmatprep.subr.mxu0 0.0
          %521 = vmatpush1.xpose.msra.mxu0 0.0
          %522 = vmatprep.subr.mxu0 0.0
          %523 = vmatpush1.xpose.msra.mxu0 0.0
          %524 = vmatprep.subr.mxu0 0.0
          %525 = vmatpush1.xpose.msra.mxu0 0.0
          %526 = vmatprep.subr.mxu0 0.0
          %527 = vmatpush1.xpose.msra.mxu0 0.0
          %528 = vmatprep.subr.mxu0 0.0
          %529 = vmatpush1.xpose.msra.mxu0 0.0
          %530 = vmatprep.subr.mxu0 0.0
          %531 = vmatpush1.xpose.msra.mxu0 0.0
          %532 = vmatprep.subr.mxu0 0.0
          %533 = vmatpush1.xpose.msra.mxu0 0.0
          %534 = vmatprep.subr.mxu0 0.0
          %535 = vmatpush1.xpose.msra.mxu0 0.0
          %536 = vmatprep.subr.mxu0 0.0
          %537 = vmatpush1.xpose.msra.mxu0 0.0
          %538 = vmatprep.subr.mxu0 0.0
          %539 = vmatpush1.xpose.msra.mxu0 0.0
          %540 = vmatprep.subr.mxu0 0.0
          %541 = vmatpush1.xpose.msra.mxu0 0.0
          %542 = vmatprep.subr.mxu0 0.0
          %543 = vmatpush1.xpose.msra.mxu0 0.0
          %544 = vmatprep.subr.mxu0 0.0
          %545 = vmatpush1.xpose.msra.mxu0 0.0
          %546 = vmatprep.subr.mxu0 0.0
          %547 = vmatpush1.xpose.msra.mxu0 0.0
          %548 = vmatprep.subr.mxu0 0.0
          %549 = vmatpush1.xpose.msra.mxu0 0.0
          %550 = vmatprep.subr.mxu0 0.0
          %551 = vmatpush1.xpose.msra.mxu0 0.0
          %552 = vmatprep.subr.mxu0 0.0
          %553 = vmatpush1.xpose.msra.mxu0 0.0
          %554 = vmatprep.subr.mxu0 0.0
          %555 = vmatpush1.xpose.msra.mxu0 0.0
          %556 = vmatprep.subr.mxu0 0.0
          %557 = vmatpush1.xpose.msra.mxu0 0.0
          %558 = vmatprep.subr.mxu0 0.0
          %559 = vmatpush1.xpose.msra.mxu0 0.0
          %560 = vmatprep.subr.mxu0 0.0
          %561 = vmatpush1.xpose.msra.mxu0 0.0
          %562 = vmatprep.subr.mxu0 0.0
          %563 = vmatpush1.xpose.msra.mxu0 0.0
          %564 = vmatprep.mubr.f32.mxu0 0.0
          %565 = vmatmul.mubr.f32.gmra.mrb[0].mxu0 %v486
          %v566 = vpop.f32.mrb[0].mxu0
          %v567 = vadd.f32 %v482, %v566
          %v568 = vpop.f32.mrb[0].mxu0
          %569 = vdwg.mxu0
          %v570 = vtanh.pop %v567
          %v572 = vlaneseq
          %v573 = vshrl.u32 %v572, 7
          %v574 = vsub.s32 0, %v573
          %v575 = vrot.slane %v477, %v574
          %vm577 = vcmask 261120
          %v579 = vsel %vm577, %v570, 0
          %v582 = vsel %vm577, %v476, 0
          %584 = vmatprep.subr.mxu0 0.0
          %585 = vmatpush1.xpose.msra.mxu0 %v582
          %586 = vmatprep.subr.mxu0 0.0
          %587 = vmatpush1.xpose.msra.mxu0 0.0
          %588 = vmatprep.subr.mxu0 0.0
          %589 = vmatpush1.xpose.msra.mxu0 0.0
          %590 = vmatprep.subr.mxu0 0.0
          %591 = vmatpush1.xpose.msra.mxu0 0.0
          %592 = vmatprep.subr.mxu0 0.0
          %593 = vmatpush1.xpose.msra.mxu0 0.0
          %594 = vmatprep.subr.mxu0 0.0
          %595 = vmatpush1.xpose.msra.mxu0 0.0
          %596 = vmatprep.subr.mxu0 0.0
          %597 = vmatpush1.xpose.msra.mxu0 0.0
          %598 = vmatprep.subr.mxu0 0.0
          %599 = vmatpush1.xpose.msra.mxu0 0.0
          %600 = vmatprep.subr.mxu0 0.0
          %601 = vmatpush1.xpose.msra.mxu0 0.0
          %602 = vmatprep.subr.mxu0 0.0
          %603 = vmatpush1.xpose.msra.mxu0 0.0
          %604 = vmatprep.subr.mxu0 0.0
          %605 = vmatpush1.xpose.msra.mxu0 0.0
          %606 = vmatprep.subr.mxu0 0.0
          %607 = vmatpush1.xpose.msra.mxu0 0.0
          %608 = vmatprep.subr.mxu0 0.0
          %609 = vmatpush1.xpose.msra.mxu0 0.0
          %610 = vmatprep.subr.mxu0 0.0
          %611 = vmatpush1.xpose.msra.mxu0 0.0
          %612 = vmatprep.subr.mxu0 0.0
          %613 = vmatpush1.xpose.msra.mxu0 0.0
          %614 = vmatprep.subr.mxu0 0.0
          %615 = vmatpush1.xpose.msra.mxu0 0.0
          %616 = vmatprep.subr.mxu0 0.0
          %617 = vmatpush1.xpose.msra.mxu0 0.0
          %618 = vmatprep.subr.mxu0 0.0
          %619 = vmatpush1.xpose.msra.mxu0 0.0
          %620 = vmatprep.subr.mxu0 0.0
          %621 = vmatpush1.xpose.msra.mxu0 0.0
          %622 = vmatprep.subr.mxu0 0.0
          %623 = vmatpush1.xpose.msra.mxu0 0.0
          %624 = vmatprep.subr.mxu0 0.0
          %625 = vmatpush1.xpose.msra.mxu0 0.0
          %626 = vmatprep.subr.mxu0 0.0
          %627 = vmatpush1.xpose.msra.mxu0 0.0
          %628 = vmatprep.subr.mxu0 0.0
          %629 = vmatpush1.xpose.msra.mxu0 0.0
          %630 = vmatprep.subr.mxu0 0.0
          %631 = vmatpush1.xpose.msra.mxu0 0.0
          %632 = vmatprep.subr.mxu0 0.0
          %633 = vmatpush1.xpose.msra.mxu0 0.0
          %634 = vmatprep.subr.mxu0 0.0
          %635 = vmatpush1.xpose.msra.mxu0 0.0
          %636 = vmatprep.subr.mxu0 0.0
          %637 = vmatpush1.xpose.msra.mxu0 0.0
          %638 = vmatprep.subr.mxu0 0.0
          %639 = vmatpush1.xpose.msra.mxu0 0.0
          %640 = vmatprep.subr.mxu0 0.0
          %641 = vmatpush1.xpose.msra.mxu0 0.0
          %642 = vmatprep.subr.mxu0 0.0
          %643 = vmatpush1.xpose.msra.mxu0 0.0
          %644 = vmatprep.subr.mxu0 0.0
          %645 = vmatpush1.xpose.msra.mxu0 0.0
          %646 = vmatprep.subr.mxu0 0.0
          %647 = vmatpush1.xpose.msra.mxu0 0.0
          %648 = vmatprep.mubr.f32.mxu0 0.0
          %649 = vmatmul.mubr.f32.gmra.mrb[0].mxu0 %v579
          %v650 = vpop.f32.mrb[0].mxu0
          %v651 = vadd.f32 %v575, %v650
          %v652 = vpop.f32.mrb[0].mxu0
          %653 = vdwg.mxu0
          %vm654 = vcmask 31744
          %655 = vst.msk [vmem:[%s465] sm:$0xff] %vm654, %v651
          %v656 = vmul.f32 %v570, %v570
          %v657 = vsub.f32 1.0, %v656
          %v658 = vlaneseq
          %v659 = vshrl.u32 %v658, 7
          %v660 = vsub.s32 0, %v659
          %v661 = vrot.slane %v476, %v660
          %v662 = vmul.f32 %v657, %v661
          %663 = vrot.lane.b32.xlu0 %v570, 32
          %v664 = vpop.permute.xlu0 %663
          %v666 = vsel %vm577, %v662, %v664
          %vm667 = vcmask 523264
          %668 = vst.msk [vmem:[#allocation2] sm:$0xff] %vm667, %v666
        $region60: #{parallel_jacobian.1} parent=55 // pred_fallthru
          _
        %v669 = vld [vmem:[#allocation2] sm:$0xff]
        %v670 = vld [vmem:[%s437] sm:$0xff]
        %v671 = vld [vmem:[%s442] sm:$0xff]
        %v672 = vld [vmem:[%s442 + $0x8] sm:$0xff]
        %v673 = vld [vmem:[%s442 + $0x10] sm:$0xff]
        %v674 = vld [vmem:[%s442 + $0x18] sm:$0xff]
        %v675 = vld [vmem:[%s442 + $0x20] sm:$0xff]
        %v676 = vld [vmem:[%s442 + $0x28] sm:$0xff]
        %v677 = vld [vmem:[%s442 + $0x30] sm:$0xff]
        %v678 = vld [vmem:[%s442 + $0x38] sm:$0xff]
        %v679 = vld [vmem:[%s442 + $0x40] sm:$0xff]
        %v680 = vld [vmem:[%s442 + $0x48] sm:$0xff]
        %v681 = vld [vmem:[%s442 + $0x50] sm:$0xff]
        %v682 = vld [vmem:[%s442 + $0x58] sm:$0xff]
        %v683 = vld [vmem:[%s442 + $0x60] sm:$0xff]
        %v684 = vld [vmem:[%s442 + $0x68] sm:$0xff]
        %v685 = vld [vmem:[%s442 + $0x70] sm:$0xff]
        %v686 = vld [vmem:[%s442 + $0x78] sm:$0xff]
        %v687 = vld [vmem:[%s442 + $0x80] sm:$0xff]
        %v688 = vld [vmem:[%s442 + $0x88] sm:$0xff]
        %v689 = vld [vmem:[%s442 + $0x90] sm:$0xff]
        %v690 = vld [vmem:[%s442 + $0x98] sm:$0xff]
        %v691 = vld [vmem:[%s442 + $0xa0] sm:$0xff]
        %v692 = vld [vmem:[%s442 + $0xa8] sm:$0xff]
        %v693 = vld [vmem:[%s442 + $0xb0] sm:$0xff]
        %v694 = vld [vmem:[%s442 + $0xb8] sm:$0xff]
        %vm695 = vcmask 261120
        %v697 = vsel %vm695, %v669, 0
        %699 = vmatprep.subr.mxu0 %v672
        %700 = vmatpush1.msra.mxu0 %v671
        %701 = vmatprep.subr.mxu0 %v678
        %702 = vmatpush1.msra.mxu0 %v677
        %703 = vmatprep.subr.mxu0 %v684
        %704 = vmatpush1.msra.mxu0 %v683
        %705 = vmatprep.subr.mxu0 %v690
        %706 = vmatpush1.msra.mxu0 %v689
        %707 = vmatprep.subr.mxu0 0.0
        %708 = vmatpush1.msra.mxu0 0.0
        %709 = vmatprep.subr.mxu0 0.0
        %710 = vmatpush1.msra.mxu0 0.0
        %711 = vmatprep.subr.mxu0 0.0
        %712 = vmatpush1.msra.mxu0 0.0
        %713 = vmatprep.subr.mxu0 0.0
        %714 = vmatpush1.msra.mxu0 0.0
        %715 = vmatprep.subr.mxu0 0.0
        %716 = vmatpush1.msra.mxu0 0.0
        %717 = vmatprep.subr.mxu0 0.0
        %718 = vmatpush1.msra.mxu0 0.0
        %719 = vmatprep.subr.mxu0 0.0
        %720 = vmatpush1.msra.mxu0 0.0
        %721 = vmatprep.subr.mxu0 0.0
        %722 = vmatpush1.msra.mxu0 0.0
        %723 = vmatprep.subr.mxu0 0.0
        %724 = vmatpush1.msra.mxu0 0.0
        %725 = vmatprep.subr.mxu0 0.0
        %726 = vmatpush1.msra.mxu0 0.0
        %727 = vmatprep.subr.mxu0 0.0
        %728 = vmatpush1.msra.mxu0 0.0
        %729 = vmatprep.subr.mxu0 0.0
        %730 = vmatpush1.msra.mxu0 0.0
        %731 = vmatprep.subr.mxu0 0.0
        %732 = vmatpush1.msra.mxu0 0.0
        %733 = vmatprep.subr.mxu0 0.0
        %734 = vmatpush1.msra.mxu0 0.0
        %735 = vmatprep.subr.mxu0 0.0
        %736 = vmatpush1.msra.mxu0 0.0
        %737 = vmatprep.subr.mxu0 0.0
        %738 = vmatpush1.msra.mxu0 0.0
        %739 = vmatprep.subr.mxu0 0.0
        %740 = vmatpush1.msra.mxu0 0.0
        %741 = vmatprep.subr.mxu0 0.0
        %742 = vmatpush1.msra.mxu0 0.0
        %743 = vmatprep.subr.mxu0 0.0
        %744 = vmatpush1.msra.mxu0 0.0
        %745 = vmatprep.subr.mxu0 0.0
        %746 = vmatpush1.msra.mxu0 0.0
        %747 = vmatprep.subr.mxu0 0.0
        %748 = vmatpush1.msra.mxu0 0.0
        %749 = vmatprep.subr.mxu0 0.0
        %750 = vmatpush1.msra.mxu0 0.0
        %751 = vmatprep.subr.mxu0 0.0
        %752 = vmatpush1.msra.mxu0 0.0
        %753 = vmatprep.subr.mxu0 0.0
        %754 = vmatpush1.msra.mxu0 0.0
        %755 = vmatprep.subr.mxu0 0.0
        %756 = vmatpush1.msra.mxu0 0.0
        %757 = vmatprep.subr.mxu0 0.0
        %758 = vmatpush1.msra.mxu0 0.0
        %759 = vmatprep.subr.mxu0 0.0
        %760 = vmatpush1.msra.mxu0 0.0
        %761 = vmatprep.subr.mxu0 0.0
        %762 = vmatpush1.msra.mxu0 0.0
        %763 = vmatprep.mubr.f32.mxu0 0.0
        %764 = vmatmul.mubr.f32.gmra.mrb[0].mxu0 %v697
        %v765 = vpop.f32.mrb[0].mxu0
        %v766 = vadd.f32 0.0, %v765
        %v767 = vpop.f32.mrb[0].mxu0
        %v768 = vadd.f32 0.0, %v767
        %769 = vdwg.mxu0
        %770 = vmatprep.subr.mxu0 %v674
        %771 = vmatpush1.msra.mxu0 %v673
        %772 = vmatprep.subr.mxu0 %v680
        %773 = vmatpush1.msra.mxu0 %v679
        %774 = vmatprep.subr.mxu0 %v686
        %775 = vmatpush1.msra.mxu0 %v685
        %776 = vmatprep.subr.mxu0 %v692
        %777 = vmatpush1.msra.mxu0 %v691
        %778 = vmatprep.subr.mxu0 0.0
        %779 = vmatpush1.msra.mxu0 0.0
        %780 = vmatprep.subr.mxu0 0.0
        %781 = vmatpush1.msra.mxu0 0.0
        %782 = vmatprep.subr.mxu0 0.0
        %783 = vmatpush1.msra.mxu0 0.0
        %784 = vmatprep.subr.mxu0 0.0
        %785 = vmatpush1.msra.mxu0 0.0
        %786 = vmatprep.subr.mxu0 0.0
        %787 = vmatpush1.msra.mxu0 0.0
        %788 = vmatprep.subr.mxu0 0.0
        %789 = vmatpush1.msra.mxu0 0.0
        %790 = vmatprep.subr.mxu0 0.0
        %791 = vmatpush1.msra.mxu0 0.0
        %792 = vmatprep.subr.mxu0 0.0
        %793 = vmatpush1.msra.mxu0 0.0
        %794 = vmatprep.subr.mxu0 0.0
        %795 = vmatpush1.msra.mxu0 0.0
        %796 = vmatprep.subr.mxu0 0.0
        %797 = vmatpush1.msra.mxu0 0.0
        %798 = vmatprep.subr.mxu0 0.0
        %799 = vmatpush1.msra.mxu0 0.0
        %800 = vmatprep.subr.mxu0 0.0
        %801 = vmatpush1.msra.mxu0 0.0
        %802 = vmatprep.subr.mxu0 0.0
        %803 = vmatpush1.msra.mxu0 0.0
        %804 = vmatprep.subr.mxu0 0.0
        %805 = vmatpush1.msra.mxu0 0.0
        %806 = vmatprep.subr.mxu0 0.0
        %807 = vmatpush1.msra.mxu0 0.0
        %808 = vmatprep.subr.mxu0 0.0
        %809 = vmatpush1.msra.mxu0 0.0
        %810 = vmatprep.subr.mxu0 0.0
        %811 = vmatpush1.msra.mxu0 0.0
        %812 = vmatprep.subr.mxu0 0.0
        %813 = vmatpush1.msra.mxu0 0.0
        %814 = vmatprep.subr.mxu0 0.0
        %815 = vmatpush1.msra.mxu0 0.0
        %816 = vmatprep.subr.mxu0 0.0
        %817 = vmatpush1.msra.mxu0 0.0
        %818 = vmatprep.subr.mxu0 0.0
        %819 = vmatpush1.msra.mxu0 0.0
        %820 = vmatprep.subr.mxu0 0.0
        %821 = vmatpush1.msra.mxu0 0.0
        %822 = vmatprep.subr.mxu0 0.0
        %823 = vmatpush1.msra.mxu0 0.0
        %824 = vmatprep.subr.mxu0 0.0
        %825 = vmatpush1.msra.mxu0 0.0
        %826 = vmatprep.subr.mxu0 0.0
        %827 = vmatpush1.msra.mxu0 0.0
        %828 = vmatprep.subr.mxu0 0.0
        %829 = vmatpush1.msra.mxu0 0.0
        %830 = vmatprep.subr.mxu0 0.0
        %831 = vmatpush1.msra.mxu0 0.0
        %832 = vmatprep.subr.mxu0 0.0
        %833 = vmatpush1.msra.mxu0 0.0
        %834 = vmatprep.mubr.f32.mxu0 0.0
        %835 = vmatmul.mubr.f32.gmra.mrb[0].mxu0 %v697
        %v836 = vpop.f32.mrb[0].mxu0
        %v837 = vadd.f32 0.0, %v836
        %v838 = vpop.f32.mrb[0].mxu0
        %v839 = vadd.f32 0.0, %v838
        %840 = vdwg.mxu0
        %841 = vmatprep.subr.mxu0 %v676
        %842 = vmatpush1.msra.mxu0 %v675
        %843 = vmatprep.subr.mxu0 %v682
        %844 = vmatpush1.msra.mxu0 %v681
        %845 = vmatprep.subr.mxu0 %v688
        %846 = vmatpush1.msra.mxu0 %v687
        %847 = vmatprep.subr.mxu0 %v694
        %848 = vmatpush1.msra.mxu0 %v693
        %849 = vmatprep.subr.mxu0 0.0
        %850 = vmatpush1.msra.mxu0 0.0
        %851 = vmatprep.subr.mxu0 0.0
        %852 = vmatpush1.msra.mxu0 0.0
        %853 = vmatprep.subr.mxu0 0.0
        %854 = vmatpush1.msra.mxu0 0.0
        %855 = vmatprep.subr.mxu0 0.0
        %856 = vmatpush1.msra.mxu0 0.0
        %857 = vmatprep.subr.mxu0 0.0
        %858 = vmatpush1.msra.mxu0 0.0
        %859 = vmatprep.subr.mxu0 0.0
        %860 = vmatpush1.msra.mxu0 0.0
        %861 = vmatprep.subr.mxu0 0.0
        %862 = vmatpush1.msra.mxu0 0.0
        %863 = vmatprep.subr.mxu0 0.0
        %864 = vmatpush1.msra.mxu0 0.0
        %865 = vmatprep.subr.mxu0 0.0
        %866 = vmatpush1.msra.mxu0 0.0
        %867 = vmatprep.subr.mxu0 0.0
        %868 = vmatpush1.msra.mxu0 0.0
        %869 = vmatprep.subr.mxu0 0.0
        %870 = vmatpush1.msra.mxu0 0.0
        %871 = vmatprep.subr.mxu0 0.0
        %872 = vmatpush1.msra.mxu0 0.0
        %873 = vmatprep.subr.mxu0 0.0
        %874 = vmatpush1.msra.mxu0 0.0
        %875 = vmatprep.subr.mxu0 0.0
        %876 = vmatpush1.msra.mxu0 0.0
        %877 = vmatprep.subr.mxu0 0.0
        %878 = vmatpush1.msra.mxu0 0.0
        %879 = vmatprep.subr.mxu0 0.0
        %880 = vmatpush1.msra.mxu0 0.0
        %881 = vmatprep.subr.mxu0 0.0
        %882 = vmatpush1.msra.mxu0 0.0
        %883 = vmatprep.subr.mxu0 0.0
        %884 = vmatpush1.msra.mxu0 0.0
        %885 = vmatprep.subr.mxu0 0.0
        %886 = vmatpush1.msra.mxu0 0.0
        %887 = vmatprep.subr.mxu0 0.0
        %888 = vmatpush1.msra.mxu0 0.0
        %889 = vmatprep.subr.mxu0 0.0
        %890 = vmatpush1.msra.mxu0 0.0
        %891 = vmatprep.subr.mxu0 0.0
        %892 = vmatpush1.msra.mxu0 0.0
        %893 = vmatprep.subr.mxu0 0.0
        %894 = vmatpush1.msra.mxu0 0.0
        %895 = vmatprep.subr.mxu0 0.0
        %896 = vmatpush1.msra.mxu0 0.0
        %897 = vmatprep.subr.mxu0 0.0
        %898 = vmatpush1.msra.mxu0 0.0
        %899 = vmatprep.subr.mxu0 0.0
        %900 = vmatpush1.msra.mxu0 0.0
        %901 = vmatprep.subr.mxu0 0.0
        %902 = vmatpush1.msra.mxu0 0.0
        %903 = vmatprep.subr.mxu0 0.0
        %904 = vmatpush1.msra.mxu0 0.0
        %905 = vmatprep.mubr.f32.mxu0 0.0
        %906 = vmatmul.mubr.f32.gmra.mrb[0].mxu0 %v697
        %v907 = vpop.f32.mrb[0].mxu0
        %v908 = vadd.f32 0.0, %v907
        %v909 = vpop.f32.mrb[0].mxu0
        %v910 = vadd.f32 0.0, %v909
        %911 = vdwg.mxu0
        %v912 = vld [vmem:[%s448] sm:$0xff]
        %v913 = vld [vmem:[%s448 + $0x8] sm:$0xff]
        %v914 = vld [vmem:[%s448 + $0x10] sm:$0xff]
        %v915 = vld [vmem:[%s448 + $0x18] sm:$0xff]
        %v916 = vld [vmem:[%s448 + $0x20] sm:$0xff]
        %v917 = vld [vmem:[%s448 + $0x28] sm:$0xff]
        %v918 = vld [vmem:[%s448 + $0x30] sm:$0xff]
        %v919 = vld [vmem:[%s448 + $0x38] sm:$0xff]
        %v920 = vld [vmem:[%s448 + $0x40] sm:$0xff]
        %v921 = vld [vmem:[%s448 + $0x48] sm:$0xff]
        %v922 = vld [vmem:[%s448 + $0x50] sm:$0xff]
        %v923 = vld [vmem:[%s448 + $0x58] sm:$0xff]
        %vm924 = vcmask 130048
        %v926 = vsel %vm924, %v670, 0
        %928 = vmatprep.subr.mxu0 %v913
        %929 = vmatpush1.msra.mxu0 %v912
        %930 = vmatprep.subr.mxu0 %v919
        %931 = vmatpush1.msra.mxu0 %v918
        %932 = vmatprep.subr.mxu0 0.0
        %933 = vmatpush1.msra.mxu0 0.0
        %934 = vmatprep.subr.mxu0 0.0
        %935 = vmatpush1.msra.mxu0 0.0
        %936 = vmatprep.subr.mxu0 0.0
        %937 = vmatpush1.msra.mxu0 0.0
        %938 = vmatprep.subr.mxu0 0.0
        %939 = vmatpush1.msra.mxu0 0.0
        %940 = vmatprep.subr.mxu0 0.0
        %941 = vmatpush1.msra.mxu0 0.0
        %942 = vmatprep.subr.mxu0 0.0
        %943 = vmatpush1.msra.mxu0 0.0
        %944 = vmatprep.subr.mxu0 0.0
        %945 = vmatpush1.msra.mxu0 0.0
        %946 = vmatprep.subr.mxu0 0.0
        %947 = vmatpush1.msra.mxu0 0.0
        %948 = vmatprep.subr.mxu0 0.0
        %949 = vmatpush1.msra.mxu0 0.0
        %950 = vmatprep.subr.mxu0 0.0
        %951 = vmatpush1.msra.mxu0 0.0
        %952 = vmatprep.subr.mxu0 0.0
        %953 = vmatpush1.msra.mxu0 0.0
        %954 = vmatprep.subr.mxu0 0.0
        %955 = vmatpush1.msra.mxu0 0.0
        %956 = vmatprep.subr.mxu0 0.0
        %957 = vmatpush1.msra.mxu0 0.0
        %958 = vmatprep.subr.mxu0 0.0
        %959 = vmatpush1.msra.mxu0 0.0
        %960 = vmatprep.subr.mxu0 0.0
        %961 = vmatpush1.msra.mxu0 0.0
        %962 = vmatprep.subr.mxu0 0.0
        %963 = vmatpush1.msra.mxu0 0.0
        %964 = vmatprep.subr.mxu0 0.0
        %965 = vmatpush1.msra.mxu0 0.0
        %966 = vmatprep.subr.mxu0 0.0
        %967 = vmatpush1.msra.mxu0 0.0
        %968 = vmatprep.subr.mxu0 0.0
        %969 = vmatpush1.msra.mxu0 0.0
        %970 = vmatprep.subr.mxu0 0.0
        %971 = vmatpush1.msra.mxu0 0.0
        %972 = vmatprep.subr.mxu0 0.0
        %973 = vmatpush1.msra.mxu0 0.0
        %974 = vmatprep.subr.mxu0 0.0
        %975 = vmatpush1.msra.mxu0 0.0
        %976 = vmatprep.subr.mxu0 0.0
        %977 = vmatpush1.msra.mxu0 0.0
        %978 = vmatprep.subr.mxu0 0.0
        %979 = vmatpush1.msra.mxu0 0.0
        %980 = vmatprep.subr.mxu0 0.0
        %981 = vmatpush1.msra.mxu0 0.0
        %982 = vmatprep.subr.mxu0 0.0
        %983 = vmatpush1.msra.mxu0 0.0
        %984 = vmatprep.subr.mxu0 0.0
        %985 = vmatpush1.msra.mxu0 0.0
        %986 = vmatprep.subr.mxu0 0.0
        %987 = vmatpush1.msra.mxu0 0.0
        %988 = vmatprep.subr.mxu0 0.0
        %989 = vmatpush1.msra.mxu0 0.0
        %990 = vmatprep.subr.mxu0 0.0
        %991 = vmatpush1.msra.mxu0 0.0
        %992 = vmatprep.mubr.f32.mxu0 0.0
        %993 = vmatmul.mubr.f32.gmra.mrb[0].mxu0 %v926
        %v994 = vpop.f32.mrb[0].mxu0
        %v995 = vadd.f32 0.0, %v994
        %v996 = vpop.f32.mrb[0].mxu0
        %v997 = vadd.f32 0.0, %v996
        %998 = vdwg.mxu0
        %999 = vmatprep.subr.mxu0 %v915
        %1000 = vmatpush1.msra.mxu0 %v914
        %1001 = vmatprep.subr.mxu0 %v921
        %1002 = vmatpush1.msra.mxu0 %v920
        %1003 = vmatprep.subr.mxu0 0.0
        %1004 = vmatpush1.msra.mxu0 0.0
        %1005 = vmatprep.subr.mxu0 0.0
        %1006 = vmatpush1.msra.mxu0 0.0
        %1007 = vmatprep.subr.mxu0 0.0
        %1008 = vmatpush1.msra.mxu0 0.0
        %1009 = vmatprep.subr.mxu0 0.0
        %1010 = vmatpush1.msra.mxu0 0.0
        %1011 = vmatprep.subr.mxu0 0.0
        %1012 = vmatpush1.msra.mxu0 0.0
        %1013 = vmatprep.subr.mxu0 0.0
        %1014 = vmatpush1.msra.mxu0 0.0
        %1015 = vmatprep.subr.mxu0 0.0
        %1016 = vmatpush1.msra.mxu0 0.0
        %1017 = vmatprep.subr.mxu0 0.0
        %1018 = vmatpush1.msra.mxu0 0.0
        %1019 = vmatprep.subr.mxu0 0.0
        %1020 = vmatpush1.msra.mxu0 0.0
        %1021 = vmatprep.subr.mxu0 0.0
        %1022 = vmatpush1.msra.mxu0 0.0
        %1023 = vmatprep.subr.mxu0 0.0
        %1024 = vmatpush1.msra.mxu0 0.0
        %1025 = vmatprep.subr.mxu0 0.0
        %1026 = vmatpush1.msra.mxu0 0.0
        %1027 = vmatprep.subr.mxu0 0.0
        %1028 = vmatpush1.msra.mxu0 0.0
        %1029 = vmatprep.subr.mxu0 0.0
        %1030 = vmatpush1.msra.mxu0 0.0
        %1031 = vmatprep.subr.mxu0 0.0
        %1032 = vmatpush1.msra.mxu0 0.0
        %1033 = vmatprep.subr.mxu0 0.0
        %1034 = vmatpush1.msra.mxu0 0.0
        %1035 = vmatprep.subr.mxu0 0.0
        %1036 = vmatpush1.msra.mxu0 0.0
        %1037 = vmatprep.subr.mxu0 0.0
        %1038 = vmatpush1.msra.mxu0 0.0
        %1039 = vmatprep.subr.mxu0 0.0
        %1040 = vmatpush1.msra.mxu0 0.0
        %1041 = vmatprep.subr.mxu0 0.0
        %1042 = vmatpush1.msra.mxu0 0.0
        %1043 = vmatprep.subr.mxu0 0.0
        %1044 = vmatpush1.msra.mxu0 0.0
        %1045 = vmatprep.subr.mxu0 0.0
        %1046 = vmatpush1.msra.mxu0 0.0
        %1047 = vmatprep.subr.mxu0 0.0
        %1048 = vmatpush1.msra.mxu0 0.0
        %1049 = vmatprep.subr.mxu0 0.0
        %1050 = vmatpush1.msra.mxu0 0.0
        %1051 = vmatprep.subr.mxu0 0.0
        %1052 = vmatpush1.msra.mxu0 0.0
        %1053 = vmatprep.subr.mxu0 0.0
        %1054 = vmatpush1.msra.mxu0 0.0
        %1055 = vmatprep.subr.mxu0 0.0
        %1056 = vmatpush1.msra.mxu0 0.0
        %1057 = vmatprep.subr.mxu0 0.0
        %1058 = vmatpush1.msra.mxu0 0.0
        %1059 = vmatprep.subr.mxu0 0.0
        %1060 = vmatpush1.msra.mxu0 0.0
        %1061 = vmatprep.subr.mxu0 0.0
        %1062 = vmatpush1.msra.mxu0 0.0
        %1063 = vmatprep.mubr.f32.mxu0 0.0
        %1064 = vmatmul.mubr.f32.gmra.mrb[0].mxu0 %v926
        %v1065 = vpop.f32.mrb[0].mxu0
        %v1066 = vadd.f32 0.0, %v1065
        %v1067 = vpop.f32.mrb[0].mxu0
        %v1068 = vadd.f32 0.0, %v1067
        %1069 = vdwg.mxu0
        %1070 = vmatprep.subr.mxu0 %v917
        %1071 = vmatpush1.msra.mxu0 %v916
        %1072 = vmatprep.subr.mxu0 %v923
        %1073 = vmatpush1.msra.mxu0 %v922
        %1074 = vmatprep.subr.mxu0 0.0
        %1075 = vmatpush1.msra.mxu0 0.0
        %1076 = vmatprep.subr.mxu0 0.0
        %1077 = vmatpush1.msra.mxu0 0.0
        %1078 = vmatprep.subr.mxu0 0.0
        %1079 = vmatpush1.msra.mxu0 0.0
        %1080 = vmatprep.subr.mxu0 0.0
        %1081 = vmatpush1.msra.mxu0 0.0
        %1082 = vmatprep.subr.mxu0 0.0
        %1083 = vmatpush1.msra.mxu0 0.0
        %1084 = vmatprep.subr.mxu0 0.0
        %1085 = vmatpush1.msra.mxu0 0.0
        %1086 = vmatprep.subr.mxu0 0.0
        %1087 = vmatpush1.msra.mxu0 0.0
        %1088 = vmatprep.subr.mxu0 0.0
        %1089 = vmatpush1.msra.mxu0 0.0
        %1090 = vmatprep.subr.mxu0 0.0
        %1091 = vmatpush1.msra.mxu0 0.0
        %1092 = vmatprep.subr.mxu0 0.0
        %1093 = vmatpush1.msra.mxu0 0.0
        %1094 = vmatprep.subr.mxu0 0.0
        %1095 = vmatpush1.msra.mxu0 0.0
        %1096 = vmatprep.subr.mxu0 0.0
        %1097 = vmatpush1.msra.mxu0 0.0
        %1098 = vmatprep.subr.mxu0 0.0
        %1099 = vmatpush1.msra.mxu0 0.0
        %1100 = vmatprep.subr.mxu0 0.0
        %1101 = vmatpush1.msra.mxu0 0.0
        %1102 = vmatprep.subr.mxu0 0.0
        %1103 = vmatpush1.msra.mxu0 0.0
        %1104 = vmatprep.subr.mxu0 0.0
        %1105 = vmatpush1.msra.mxu0 0.0
        %1106 = vmatprep.subr.mxu0 0.0
        %1107 = vmatpush1.msra.mxu0 0.0
        %1108 = vmatprep.subr.mxu0 0.0
        %1109 = vmatpush1.msra.mxu0 0.0
        %1110 = vmatprep.subr.mxu0 0.0
        %1111 = vmatpush1.msra.mxu0 0.0
        %1112 = vmatprep.subr.mxu0 0.0
        %1113 = vmatpush1.msra.mxu0 0.0
        %1114 = vmatprep.subr.mxu0 0.0
        %1115 = vmatpush1.msra.mxu0 0.0
        %1116 = vmatprep.subr.mxu0 0.0
        %1117 = vmatpush1.msra.mxu0 0.0
        %1118 = vmatprep.subr.mxu0 0.0
        %1119 = vmatpush1.msra.mxu0 0.0
        %1120 = vmatprep.subr.mxu0 0.0
        %1121 = vmatpush1.msra.mxu0 0.0
        %1122 = vmatprep.subr.mxu0 0.0
        %1123 = vmatpush1.msra.mxu0 0.0
        %1124 = vmatprep.subr.mxu0 0.0
        %1125 = vmatpush1.msra.mxu0 0.0
        %1126 = vmatprep.subr.mxu0 0.0
        %1127 = vmatpush1.msra.mxu0 0.0
        %1128 = vmatprep.subr.mxu0 0.0
        %1129 = vmatpush1.msra.mxu0 0.0
        %1130 = vmatprep.subr.mxu0 0.0
        %1131 = vmatpush1.msra.mxu0 0.0
        %1132 = vmatprep.subr.mxu0 0.0
        %1133 = vmatpush1.msra.mxu0 0.0
        %1134 = vmatprep.mubr.f32.mxu0 0.0
        %1135 = vmatmul.mubr.f32.gmra.mrb[0].mxu0 %v926
        %v1136 = vpop.f32.mrb[0].mxu0
        %v1137 = vadd.f32 0.0, %v1136
        %v1138 = vpop.f32.mrb[0].mxu0
        %v1139 = vadd.f32 0.0, %v1138
        %1140 = vdwg.mxu0
        %v1141 = vld [vmem:[%s454] sm:$0xff]
        %v1142 = vld [vmem:[%s454 + $0x8] sm:$0xff]
        %v1143 = vld [vmem:[%s454 + $0x10] sm:$0xff]
        %v1144 = vld [vmem:[%s454 + $0x18] sm:$0xff]
        %v1145 = vld [vmem:[%s454 + $0x20] sm:$0xff]
        %v1146 = vld [vmem:[%s454 + $0x28] sm:$0xff]
        %v1147 = vld [vmem:[%s454 + $0x30] sm:$0xff]
        %v1148 = vld [vmem:[%s454 + $0x38] sm:$0xff]
        %v1149 = vld [vmem:[%s454 + $0x40] sm:$0xff]
        %v1150 = vld [vmem:[%s454 + $0x48] sm:$0xff]
        %v1151 = vld [vmem:[%s454 + $0x50] sm:$0xff]
        %v1152 = vld [vmem:[%s454 + $0x58] sm:$0xff]
        %v1153 = vld [vmem:[%s454 + $0x60] sm:$0xff]
        %v1154 = vld [vmem:[%s454 + $0x68] sm:$0xff]
        %v1155 = vld [vmem:[%s454 + $0x70] sm:$0xff]
        %v1156 = vld [vmem:[%s454 + $0x78] sm:$0xff]
        %v1157 = vld [vmem:[%s454 + $0x80] sm:$0xff]
        %v1158 = vld [vmem:[%s454 + $0x88] sm:$0xff]
        %v1159 = vld [vmem:[%s454 + $0x90] sm:$0xff]
        %v1160 = vld [vmem:[%s454 + $0x98] sm:$0xff]
        %v1161 = vld [vmem:[%s454 + $0xa0] sm:$0xff]
        %v1162 = vld [vmem:[%s454 + $0xa8] sm:$0xff]
        %v1163 = vld [vmem:[%s454 + $0xb0] sm:$0xff]
        %v1164 = vld [vmem:[%s454 + $0xb8] sm:$0xff]
        %v1165 = vld [vmem:[%s454 + $0xc0] sm:$0xff]
        %v1166 = vld [vmem:[%s454 + $0xc8] sm:$0xff]
        %v1167 = vld [vmem:[%s454 + $0xd0] sm:$0xff]
        %v1168 = vld [vmem:[%s454 + $0xd8] sm:$0xff]
        %v1169 = vld [vmem:[%s454 + $0xe0] sm:$0xff]
        %v1170 = vld [vmem:[%s454 + $0xe8] sm:$0xff]
        %v1171 = vld [vmem:[%s454 + $0xf0] sm:$0xff]
        %v1172 = vld [vmem:[%s454 + $0xf8] sm:$0xff]
        %v1173 = vld [vmem:[%s454 + $0x100] sm:$0xff]
        %v1174 = vld [vmem:[%s454 + $0x108] sm:$0xff]
        %v1175 = vld [vmem:[%s454 + $0x110] sm:$0xff]
        %v1176 = vld [vmem:[%s454 + $0x118] sm:$0xff]
        %v1177 = vld [vmem:[%s454 + $0x120] sm:$0xff]
        %v1178 = vld [vmem:[%s454 + $0x128] sm:$0xff]
        %v1179 = vld [vmem:[%s454 + $0x130] sm:$0xff]
        %v1180 = vld [vmem:[%s454 + $0x138] sm:$0xff]
        %v1181 = vld [vmem:[%s454 + $0x140] sm:$0xff]
        %v1182 = vld [vmem:[%s454 + $0x148] sm:$0xff]
        %v1183 = vld [vmem:[%s454 + $0x150] sm:$0xff]
        %v1184 = vld [vmem:[%s454 + $0x158] sm:$0xff]
        %v1185 = vld [vmem:[%s454 + $0x160] sm:$0xff]
        %v1186 = vld [vmem:[%s454 + $0x168] sm:$0xff]
        %v1187 = vld [vmem:[%s454 + $0x170] sm:$0xff]
        %v1188 = vld [vmem:[%s454 + $0x178] sm:$0xff]
        %vm1189 = vcmask 523264
        %v1190 = vsel %vm1189, %v669, 0
        %1192 = vmatprep.subr.mxu0 %v1142
        %1193 = vmatpush1.msra.mxu0 %v1141
        %1194 = vmatprep.subr.mxu0 %v1148
        %1195 = vmatpush1.msra.mxu0 %v1147
        %1196 = vmatprep.subr.mxu0 %v1154
        %1197 = vmatpush1.msra.mxu0 %v1153
        %1198 = vmatprep.subr.mxu0 %v1160
        %1199 = vmatpush1.msra.mxu0 %v1159
        %1200 = vmatprep.subr.mxu0 %v1166
        %1201 = vmatpush1.msra.mxu0 %v1165
        %1202 = vmatprep.subr.mxu0 %v1172
        %1203 = vmatpush1.msra.mxu0 %v1171
        %1204 = vmatprep.subr.mxu0 %v1178
        %1205 = vmatpush1.msra.mxu0 %v1177
        %1206 = vmatprep.subr.mxu0 %v1184
        %1207 = vmatpush1.msra.mxu0 %v1183
        %1208 = vmatprep.subr.mxu0 0.0
        %1209 = vmatpush1.msra.mxu0 0.0
        %1210 = vmatprep.subr.mxu0 0.0
        %1211 = vmatpush1.msra.mxu0 0.0
        %1212 = vmatprep.subr.mxu0 0.0
        %1213 = vmatpush1.msra.mxu0 0.0
        %1214 = vmatprep.subr.mxu0 0.0
        %1215 = vmatpush1.msra.mxu0 0.0
        %1216 = vmatprep.subr.mxu0 0.0
        %1217 = vmatpush1.msra.mxu0 0.0
        %1218 = vmatprep.subr.mxu0 0.0
        %1219 = vmatpush1.msra.mxu0 0.0
        %1220 = vmatprep.subr.mxu0 0.0
        %1221 = vmatpush1.msra.mxu0 0.0
        %1222 = vmatprep.subr.mxu0 0.0
        %1223 = vmatpush1.msra.mxu0 0.0
        %1224 = vmatprep.subr.mxu0 0.0
        %1225 = vmatpush1.msra.mxu0 0.0
        %1226 = vmatprep.subr.mxu0 0.0
        %1227 = vmatpush1.msra.mxu0 0.0
        %1228 = vmatprep.subr.mxu0 0.0
        %1229 = vmatpush1.msra.mxu0 0.0
        %1230 = vmatprep.subr.mxu0 0.0
        %1231 = vmatpush1.msra.mxu0 0.0
        %1232 = vmatprep.subr.mxu0 0.0
        %1233 = vmatpush1.msra.mxu0 0.0
        %1234 = vmatprep.subr.mxu0 0.0
        %1235 = vmatpush1.msra.mxu0 0.0
        %1236 = vmatprep.subr.mxu0 0.0
        %1237 = vmatpush1.msra.mxu0 0.0
        %1238 = vmatprep.subr.mxu0 0.0
        %1239 = vmatpush1.msra.mxu0 0.0
        %1240 = vmatprep.subr.mxu0 0.0
        %1241 = vmatpush1.msra.mxu0 0.0
        %1242 = vmatprep.subr.mxu0 0.0
        %1243 = vmatpush1.msra.mxu0 0.0
        %1244 = vmatprep.subr.mxu0 0.0
        %1245 = vmatpush1.msra.mxu0 0.0
        %1246 = vmatprep.subr.mxu0 0.0
        %1247 = vmatpush1.msra.mxu0 0.0
        %1248 = vmatprep.subr.mxu0 0.0
        %1249 = vmatpush1.msra.mxu0 0.0
        %1250 = vmatprep.subr.mxu0 0.0
        %1251 = vmatpush1.msra.mxu0 0.0
        %1252 = vmatprep.subr.mxu0 0.0
        %1253 = vmatpush1.msra.mxu0 0.0
        %1254 = vmatprep.subr.mxu0 0.0
        %1255 = vmatpush1.msra.mxu0 0.0
        %1256 = vmatprep.mubr.f32.mxu0 0.0
        %1257 = vmatmul.mubr.f32.gmra.mrb[0].mxu0 %v1190
        %v1258 = vpop.f32.mrb[0].mxu0
        %v1259 = vadd.f32 0.0, %v1258
        %v1260 = vpop.f32.mrb[0].mxu0
        %v1261 = vadd.f32 0.0, %v1260
        %1262 = vdwg.mxu0
        %1263 = vmatprep.subr.mxu0 %v1144
        %1264 = vmatpush1.msra.mxu0 %v1143
        %1265 = vmatprep.subr.mxu0 %v1150
        %1266 = vmatpush1.msra.mxu0 %v1149
        %1267 = vmatprep.subr.mxu0 %v1156
        %1268 = vmatpush1.msra.mxu0 %v1155
        %1269 = vmatprep.subr.mxu0 %v1162
        %1270 = vmatpush1.msra.mxu0 %v1161
        %1271 = vmatprep.subr.mxu0 %v1168
        %1272 = vmatpush1.msra.mxu0 %v1167
        %1273 = vmatprep.subr.mxu0 %v1174
        %1274 = vmatpush1.msra.mxu0 %v1173
        %1275 = vmatprep.subr.mxu0 %v1180
        %1276 = vmatpush1.msra.mxu0 %v1179
        %1277 = vmatprep.subr.mxu0 %v1186
        %1278 = vmatpush1.msra.mxu0 %v1185
        %1279 = vmatprep.subr.mxu0 0.0
        %1280 = vmatpush1.msra.mxu0 0.0
        %1281 = vmatprep.subr.mxu0 0.0
        %1282 = vmatpush1.msra.mxu0 0.0
        %1283 = vmatprep.subr.mxu0 0.0
        %1284 = vmatpush1.msra.mxu0 0.0
        %1285 = vmatprep.subr.mxu0 0.0
        %1286 = vmatpush1.msra.mxu0 0.0
        %1287 = vmatprep.subr.mxu0 0.0
        %1288 = vmatpush1.msra.mxu0 0.0
        %1289 = vmatprep.subr.mxu0 0.0
        %1290 = vmatpush1.msra.mxu0 0.0
        %1291 = vmatprep.subr.mxu0 0.0
        %1292 = vmatpush1.msra.mxu0 0.0
        %1293 = vmatprep.subr.mxu0 0.0
        %1294 = vmatpush1.msra.mxu0 0.0
        %1295 = vmatprep.subr.mxu0 0.0
        %1296 = vmatpush1.msra.mxu0 0.0
        %1297 = vmatprep.subr.mxu0 0.0
        %1298 = vmatpush1.msra.mxu0 0.0
        %1299 = vmatprep.subr.mxu0 0.0
        %1300 = vmatpush1.msra.mxu0 0.0
        %1301 = vmatprep.subr.mxu0 0.0
        %1302 = vmatpush1.msra.mxu0 0.0
        %1303 = vmatprep.subr.mxu0 0.0
        %1304 = vmatpush1.msra.mxu0 0.0
        %1305 = vmatprep.subr.mxu0 0.0
        %1306 = vmatpush1.msra.mxu0 0.0
        %1307 = vmatprep.subr.mxu0 0.0
        %1308 = vmatpush1.msra.mxu0 0.0
        %1309 = vmatprep.subr.mxu0 0.0
        %1310 = vmatpush1.msra.mxu0 0.0
        %1311 = vmatprep.subr.mxu0 0.0
        %1312 = vmatpush1.msra.mxu0 0.0
        %1313 = vmatprep.subr.mxu0 0.0
        %1314 = vmatpush1.msra.mxu0 0.0
        %1315 = vmatprep.subr.mxu0 0.0
        %1316 = vmatpush1.msra.mxu0 0.0
        %1317 = vmatprep.subr.mxu0 0.0
        %1318 = vmatpush1.msra.mxu0 0.0
        %1319 = vmatprep.subr.mxu0 0.0
        %1320 = vmatpush1.msra.mxu0 0.0
        %1321 = vmatprep.subr.mxu0 0.0
        %1322 = vmatpush1.msra.mxu0 0.0
        %1323 = vmatprep.subr.mxu0 0.0
        %1324 = vmatpush1.msra.mxu0 0.0
        %1325 = vmatprep.subr.mxu0 0.0
        %1326 = vmatpush1.msra.mxu0 0.0
        %1327 = vmatprep.mubr.f32.mxu0 0.0
        %1328 = vmatmul.mubr.f32.gmra.mrb[0].mxu0 %v1190
        %v1329 = vpop.f32.mrb[0].mxu0
        %v1330 = vadd.f32 0.0, %v1329
        %v1331 = vpop.f32.mrb[0].mxu0
        %v1332 = vadd.f32 0.0, %v1331
        %1333 = vdwg.mxu0
        %1334 = vmatprep.subr.mxu0 %v1146
        %1335 = vmatpush1.msra.mxu0 %v1145
        %1336 = vmatprep.subr.mxu0 %v1152
        %1337 = vmatpush1.msra.mxu0 %v1151
        %1338 = vmatprep.subr.mxu0 %v1158
        %1339 = vmatpush1.msra.mxu0 %v1157
        %1340 = vmatprep.subr.mxu0 %v1164
        %1341 = vmatpush1.msra.mxu0 %v1163
        %1342 = vmatprep.subr.mxu0 %v1170
        %1343 = vmatpush1.msra.mxu0 %v1169
        %1344 = vmatprep.subr.mxu0 %v1176
        %1345 = vmatpush1.msra.mxu0 %v1175
        %1346 = vmatprep.subr.mxu0 %v1182
        %1347 = vmatpush1.msra.mxu0 %v1181
        %1348 = vmatprep.subr.mxu0 %v1188
        %1349 = vmatpush1.msra.mxu0 %v1187
        %1350 = vmatprep.subr.mxu0 0.0
        %1351 = vmatpush1.msra.mxu0 0.0
        %1352 = vmatprep.subr.mxu0 0.0
        %1353 = vmatpush1.msra.mxu0 0.0
        %1354 = vmatprep.subr.mxu0 0.0
        %1355 = vmatpush1.msra.mxu0 0.0
        %1356 = vmatprep.subr.mxu0 0.0
        %1357 = vmatpush1.msra.mxu0 0.0
        %1358 = vmatprep.subr.mxu0 0.0
        %1359 = vmatpush1.msra.mxu0 0.0
        %1360 = vmatprep.subr.mxu0 0.0
        %1361 = vmatpush1.msra.mxu0 0.0
        %1362 = vmatprep.subr.mxu0 0.0
        %1363 = vmatpush1.msra.mxu0 0.0
        %1364 = vmatprep.subr.mxu0 0.0
        %1365 = vmatpush1.msra.mxu0 0.0
        %1366 = vmatprep.subr.mxu0 0.0
        %1367 = vmatpush1.msra.mxu0 0.0
        %1368 = vmatprep.subr.mxu0 0.0
        %1369 = vmatpush1.msra.mxu0 0.0
        %1370 = vmatprep.subr.mxu0 0.0
        %1371 = vmatpush1.msra.mxu0 0.0
        %1372 = vmatprep.subr.mxu0 0.0
        %1373 = vmatpush1.msra.mxu0 0.0
        %1374 = vmatprep.subr.mxu0 0.0
        %1375 = vmatpush1.msra.mxu0 0.0
        %1376 = vmatprep.subr.mxu0 0.0
        %1377 = vmatpush1.msra.mxu0 0.0
        %1378 = vmatprep.subr.mxu0 0.0
        %1379 = vmatpush1.msra.mxu0 0.0
        %1380 = vmatprep.subr.mxu0 0.0
        %1381 = vmatpush1.msra.mxu0 0.0
        %1382 = vmatprep.subr.mxu0 0.0
        %1383 = vmatpush1.msra.mxu0 0.0
        %1384 = vmatprep.subr.mxu0 0.0
        %1385 = vmatpush1.msra.mxu0 0.0
        %1386 = vmatprep.subr.mxu0 0.0
        %1387 = vmatpush1.msra.mxu0 0.0
        %1388 = vmatprep.subr.mxu0 0.0
        %1389 = vmatpush1.msra.mxu0 0.0
        %1390 = vmatprep.subr.mxu0 0.0
        %1391 = vmatpush1.msra.mxu0 0.0
        %1392 = vmatprep.subr.mxu0 0.0
        %1393 = vmatpush1.msra.mxu0 0.0
        %1394 = vmatprep.subr.mxu0 0.0
        %1395 = vmatpush1.msra.mxu0 0.0
        %1396 = vmatprep.subr.mxu0 0.0
        %1397 = vmatpush1.msra.mxu0 0.0
        %1398 = vmatprep.mubr.f32.mxu0 0.0
        %1399 = vmatmul.mubr.f32.gmra.mrb[0].mxu0 %v1190
        %v1400 = vpop.f32.mrb[0].mxu0
        %v1401 = vadd.f32 0.0, %v1400
        %v1402 = vpop.f32.mrb[0].mxu0
        %v1403 = vadd.f32 0.0, %v1402
        %1404 = vdwg.mxu0
        %v1405 = vmul.f32 %v766, %v995
        %v1406 = vmul.f32 %v768, %v997
        %v1407 = vmul.f32 %v837, %v1066
        %v1408 = vmul.f32 %v839, %v1068
        %v1409 = vmul.f32 %v908, %v1137
        %v1410 = vmul.f32 %v910, %v1139
        %v1411 = vadd.f32 %v1405, %v1259
        %v1412 = vadd.f32 %v1406, %v1261
        %v1413 = vadd.f32 %v1407, %v1330
        %v1414 = vadd.f32 %v1408, %v1332
        %v1415 = vadd.f32 %v1409, %v1401
        %v1416 = vadd.f32 %v1410, %v1403
        %v1417 = vld [vmem:[%s459] sm:$0x3f]
        %v1419 = vlaneseq
        %v1420 = vshrl.u32 %v1419, 7
        %v1421 = vsub.s32 0, %v1420
        %v1422 = vrot.slane %v1417, %v1421
        %v1423 = vlaneseq
        %v1424 = vshrl.u32 %v1423, 7
        %v1425 = vsub.s32 1, %v1424
        %v1426 = vrot.slane %v1417, %v1425
        %v1427 = vlaneseq
        %v1428 = vshrl.u32 %v1427, 7
        %v1429 = vsub.s32 2, %v1428
        %v1430 = vrot.slane %v1417, %v1429
        %v1431 = vlaneseq
        %v1432 = vshrl.u32 %v1431, 7
        %v1433 = vsub.s32 3, %v1432
        %v1434 = vrot.slane %v1417, %v1433
        %v1435 = vlaneseq
        %v1436 = vshrl.u32 %v1435, 7
        %v1437 = vsub.s32 4, %v1436
        %v1438 = vrot.slane %v1417, %v1437
        %v1439 = vlaneseq
        %v1440 = vshrl.u32 %v1439, 7
        %v1441 = vsub.s32 5, %v1440
        %v1442 = vrot.slane %v1417, %v1441
        %v1449 = vadd.f32 %v1411, %v1422
        %v1450 = vadd.f32 %v1412, %v1426
        %v1451 = vadd.f32 %v1413, %v1430
        %v1452 = vadd.f32 %v1414, %v1434
        %v1453 = vadd.f32 %v1415, %v1438
        %v1454 = vadd.f32 %v1416, %v1442
        %1455 = vst [vmem:[%s427] sm:$0xff] %v1449
        %1456 = vst [vmem:[%s427 + $0x8] sm:$0xff] %v1450
        %1457 = vst [vmem:[%s427 + $0x10] sm:$0xff] %v1451
        %1458 = vst [vmem:[%s427 + $0x18] sm:$0xff] %v1452
        %1459 = vst [vmem:[%s427 + $0x20] sm:$0xff] %v1453
        %1460 = vst [vmem:[%s427 + $0x28] sm:$0xff] %v1454
        %s1461 = sand.u32 %s261, 1
        %s1462 = scalar_lea.sflag [#allocation4], %s1461
        %s1463 = sand.u32 %s261, 1
        %s1464 = smul.addr %s1463, 48
        %s1465 = scalar_lea.vmem [#allocation3], %s1464
        %p1466 = scmp.lt.s32.totalorder %s29, 1
        %s1467 = scalar_select %p1466, %s29, 1
        %s1468 = smul.addr %s1467, 8
        %s1469 = scalar_lea.vmem %s10, %s1468
        // Predicated region
        $region61: #{parallel_jacobian.1} parent=55 // pred_check
          %p1470 = pneg %p271
        $region62: #{parallel_jacobian.1} parent=55 // pred_check_branch
          %1472 = sbr.rel (%p1470) target = $region64
        $region63: #{parallel_jacobian.1} parent=55 // pred_region
          %s1473 = smul.u32 6, %s30
          %s1475 = ssub.s32 768, 768
          %1476 = vsyncadd %s1462, %s1475
          %s1477 = smul.addr %s29, 6
          %s1478 = sadd.s32 %s1473, %s1477
          %s1479 = smul.addr %s1478, 128
          %s1480 = scalar_lea.hbm %s9, %s1479
          %s1482 = sshll.u32 %s1465, 4
          %s1483 = int_to_ptr.vmem [resolvable:$true] %s1482
          %1485 = dma.vmem_to_hbm [thread:$0]  %s1483, 768, %s1480, %s1462
        $region64: #{parallel_jacobian.1} parent=55 // pred_fallthru
          _
        // Predicated region
        $region65: #{parallel_jacobian.1} parent=55 // pred_check
          %p1486 = pneg %p297
        $region66: #{parallel_jacobian.1} parent=55 // pred_check_branch
          %1488 = sbr.rel (%p1486) target = $region68
        $region67: #{parallel_jacobian.1} parent=55 // pred_region
          _
        $region68: #{parallel_jacobian.1} parent=55 // pred_fallthru
          _
      $region56: #{parallel_jacobian.1} parent=5 // pred_fallthru
        _
      %p1489 = scmp.le.s32.totalorder 2, %s20
      // Predicated region
      $region69: #{parallel_jacobian.1} parent=5 // pred_check
        %p1490 = pneg %p1489
      $region70: #{parallel_jacobian.1} parent=5 // pred_check_branch
        %1492 = sbr.rel (%p1490) target = $region72
      $region71: #{parallel_jacobian.1} parent=5 // pred_region
        %s1493 = ssub.s32 %s20, 2
        // Predicated region
        $region73: #{parallel_jacobian.1} parent=71 // pred_check
          %p1494 = pneg %p277
        $region74: #{parallel_jacobian.1} parent=71 // pred_check_branch
          %1496 = sbr.rel (%p1494) target = $region76
        $region75: #{parallel_jacobian.1} parent=71 // pred_region
          %s1497 = sand.u32 %s262, 1
          %s1498 = scalar_lea.sflag [#allocation4], %s1497
          %s1499 = sand.u32 %s262, 1
          %s1500 = smul.addr %s1499, 48
          %s1501 = scalar_lea.vmem [#allocation3], %s1500
          %1502 = dma.done %s1498, 768
        $region76: #{parallel_jacobian.1} parent=71 // pred_fallthru
          _
        // Predicated region
        $region77: #{parallel_jacobian.1} parent=71 // pred_check
          %p1503 = pneg %p303
        $region78: #{parallel_jacobian.1} parent=71 // pred_check_branch
          %1505 = sbr.rel (%p1503) target = $region80
        $region79: #{parallel_jacobian.1} parent=71 // pred_region
          %p1506 = scmp.lt.s32.totalorder %s31, 1
          %s1507 = scalar_select %p1506, %s31, 1
          %s1508 = smul.addr %s1507, 8
          %s1509 = scalar_lea.vmem %s10, %s1508
        $region80: #{parallel_jacobian.1} parent=71 // pred_fallthru
          _
      $region72: #{parallel_jacobian.1} parent=5 // pred_fallthru
        _
    $region6: #{parallel_jacobian.1} parent=1 // loop_footer
      %s24 = sadd.s32 1, %s20
    $region7: #{parallel_jacobian.1} parent=1 // loop_footer_branch
      %19 = sbr.rel target = $region3
    $region8: #{parallel_jacobian.1} parent=1 // loop_exit
      _
    %1510 = vsyncpa [#allocation4], 1
    %s1511 = scalar_lea.sflag [#allocation4], 1
    %1512 = vsyncpa %s1511, 1

</llo_original>
